<compile_context>
chip_gen: v7x
topology: tpu7x:2x2x1
jax: 0.10.0
libtpu: 0.0.40
codegen_flags: <defaults>
</compile_context>

<pallas_src>
import numpy as np
import jax
import jax.numpy as jnp
from jax.experimental import pallas as pl
from jax.experimental.pallas import tpu as pltpu

H_MATCHES = 15
W_MATCHES = 15
NUM_CH = H_MATCHES * W_MATCHES      # 225 mask channels
NUM_PIX = H_MATCHES * W_MATCHES     # 225 output pixels
OFFSET_FACTOR = 227.0 / 210.0
TPS_GRID_SIZE = 3
N_CTRL = TPS_GRID_SIZE * TPS_GRID_SIZE


# ----------------------------------------------------------------------------- parameters
def build_mask_factors():
    # mask_id[c, y, x] = 1 iff |y - (c % H)| <= 1 and |x - (c // H)| <= 1
    # (identity correlation mask dilated with the 3x3 all-ones structuring element).
    c = jnp.arange(NUM_CH)
    yc = c % H_MATCHES
    xc = c // H_MATCHES
    y = jnp.arange(H_MATCHES)
    x = jnp.arange(W_MATCHES)
    my = (jnp.abs(y[None, :] - yc[:, None]) <= 1).astype(jnp.float32)   # (C, H)
    mx = (jnp.abs(x[None, :] - xc[:, None]) <= 1).astype(jnp.float32)   # (C, W)
    return my, mx


def build_mask_id():
    my, mx = build_mask_factors()
    return my[:, :, None] * mx[:, None, :]                              # (C, H, W)


def control_points():
    ax = jnp.linspace(-1.0, 1.0, TPS_GRID_SIZE)
    PY, PX = jnp.meshgrid(ax, ax)          # matches np.meshgrid(axis, axis) ordering
    return PX.reshape(-1).astype(jnp.float32), PY.reshape(-1).astype(jnp.float32)


def base_grid():
    gX, gY = jnp.meshgrid(jnp.linspace(-1.0, 1.0, W_MATCHES),
                          jnp.linspace(-1.0, 1.0, H_MATCHES))
    return gX.astype(jnp.float32), gY.astype(jnp.float32)   # (H, W) each


# ----------------------------------------------------------------------------- glue: grids
def affine_grid(theta, gX, gY, f):
    # AffineGridGenV2 with offset_factor f (grid divided by f, result multiplied by f):
    # X' = a11*X + a12*Y + f*tx ; Y' = a21*X + a22*Y + f*ty
    t = theta.reshape(-1, 6)
    Xp = (gX[None] * t[:, 0, None, None] + gY[None] * t[:, 1, None, None]
          + f * t[:, 2, None, None])
    Yp = (gX[None] * t[:, 3, None, None] + gY[None] * t[:, 4, None, None]
          + f * t[:, 5, None, None])
    return jnp.stack([Xp, Yp], axis=-1)     # (B, H, W, 2)


def tps_grid_gen(theta, gX, gY, f):
    # TpsGridGen (grid_size=3, reg_factor=0) with offset_factor f.
    PX, PY = control_points()
    N = N_CTRL
    d2 = (PX[:, None] - PX[None, :]) ** 2 + (PY[:, None] - PY[None, :]) ** 2
    d2 = jnp.where(d2 == 0.0, 1.0, d2)
    K = d2 * jnp.log(d2)
    Pm = jnp.concatenate([jnp.ones((N, 1), jnp.float32), PX[:, None], PY[:, None]], axis=1)
    L = jnp.concatenate(
        [jnp.concatenate([K, Pm], axis=1),
         jnp.concatenate([Pm.T, jnp.zeros((3, 3), jnp.float32)], axis=1)], axis=0)
    Li = jnp.linalg.inv(L)

    QX = theta[:, :N]
    QY = theta[:, N:]
    WX = jnp.einsum('ij,bj->bi', Li[:N, :N], QX)
    WY = jnp.einsum('ij,bj->bi', Li[:N, :N], QY)
    AX = jnp.einsum('ij,bj->bi', Li[N:, :N], QX)
    AY = jnp.einsum('ij,bj->bi', Li[N:, :N], QY)

    x = gX / f
    y = gY / f
    d2p = (x[..., None] - PX) ** 2 + (y[..., None] - PY) ** 2     # (H, W, N)
    d2p = jnp.where(d2p == 0.0, 1.0, d2p)
    U = d2p * jnp.log(d2p)

    Xp = (AX[:, 0, None, None] + AX[:, 1, None, None] * x[None]
          + AX[:, 2, None, None] * y[None] + jnp.einsum('bn,hwn->bhw', WX, U))
    Yp = (AY[:, 0, None, None] + AY[:, 1, None, None] * x[None]
          + AY[:, 2, None, None] * y[None] + jnp.einsum('bn,hwn->bhw', WY, U))
    return jnp.stack([Xp, Yp], axis=-1) * f     # (B, H, W, 2)


def grid_sample_nchw(img, grid):
    # F.grid_sample, bilinear, padding_mode='zeros', align_corners=True (PyTorch 0.x).
    B, C, H, W = img.shape
    Ho, Wo = grid.shape[1], grid.shape[2]
    x = grid[..., 0]
    y = grid[..., 1]
    ix = (x + 1.0) * (W - 1) * 0.5
    iy = (y + 1.0) * (H - 1) * 0.5
    ix0 = jnp.floor(ix)
    iy0 = jnp.floor(iy)
    tx = ix - ix0
    ty = iy - iy0
    img_flat = img.reshape(B, C, H * W)
    out = jnp.zeros((B, C, Ho, Wo), img.dtype)
    for dy, wy in ((0, 1.0 - ty), (1, ty)):
        cy = iy0 + dy
        for dx, wx in ((0, 1.0 - tx), (1, tx)):
            cx = ix0 + dx
            valid = (cx >= 0) & (cx <= W - 1) & (cy >= 0) & (cy <= H - 1)
            w = wx * wy * valid.astype(img.dtype)                    # (B, Ho, Wo)
            cxi = jnp.clip(cx, 0, W - 1).astype(jnp.int32)
            cyi = jnp.clip(cy, 0, H - 1).astype(jnp.int32)
            idx = (cyi * W + cxi).reshape(B, 1, Ho * Wo)
            val = jnp.take_along_axis(img_flat,
                                      jnp.broadcast_to(idx, (B, C, Ho * Wo)), axis=2)
            out = out + w[:, None] * val.reshape(B, C, Ho, Wo)
    return out


def composed_sampling_grid(theta_aff, theta_aff_tps):
    # ComposedGeometricTnf.__call__ (affine then TPS composition of sampling grids).
    # TODO(synk): the strict (> -1, < 1) in-bound masks follow the weakalign repo glue;
    # verify once against torch for samples landing exactly on the border.
    f = OFFSET_FACTOR
    gX, gY = base_grid()
    grid_aff = affine_grid(theta_aff, gX, gY, f)                 # (B, H, W, 2)
    grid_tps = tps_grid_gen(theta_aff_tps, gX, gY, f)            # (B, H, W, 2)

    inb_aff = ((grid_aff[..., 0] > -1) & (grid_aff[..., 0] < 1) &
               (grid_aff[..., 1] > -1) & (grid_aff[..., 1] < 1)).astype(jnp.float32)[..., None]
    grid_aff = inb_aff * grid_aff + (inb_aff - 1.0) * 1e10

    comp = grid_sample_nchw(jnp.transpose(grid_aff, (0, 3, 1, 2)), grid_tps)   # (B,2,H,W)
    comp = jnp.transpose(comp, (0, 2, 3, 1))                                   # (B,H,W,2)

    inb_tps = ((grid_tps[..., 0] > -1) & (grid_tps[..., 0] < 1) &
               (grid_tps[..., 1] > -1) & (grid_tps[..., 1] < 1)).astype(jnp.float32)[..., None]
    comp = inb_tps * comp + (inb_tps - 1.0) * 1e10
    return comp


# ----------------------------------------------------------------------------- Pallas kernel
def inlier_score_pallas(comp_grid, matches):
    B = comp_grid.shape[0]
    # batch elements per grid step: as large as possible while keeping >= 2 grid blocks
    # (v7x has 2 TensorCores; the batch-block axis is the only parallel axis).
    if B <= 1:
        bt = 1
    else:
        bt = max(d for d in range(1, min(8, B // 2) + 1) if B % d == 0)
    n_blocks = B // bt

    # pixel-space sampling coordinates (align_corners=True), lane-dense rows:
    # coords[:, 0, :] = iy (row coord), coords[:, 1, :] = ix (col coord), p = y*W + x
    ix = (comp_grid[..., 0].reshape(B, NUM_PIX) + 1.0) * ((W_MATCHES - 1) * 0.5)
    iy = (comp_grid[..., 1].reshape(B, NUM_PIX) + 1.0) * ((H_MATCHES - 1) * 0.5)
    coords = jnp.stack([iy, ix], axis=1).astype(jnp.float32)            # (B, 2, P)

    # matches in its natural (B, C, P) layout: pure reshape, no transpose/pad HBM pass.
    # kept f32 (bf16 would halve the v5e HBM stream but eats into the 2e-3 tolerance).
    matches_cp = matches.reshape(B, NUM_CH, NUM_PIX).astype(jnp.float32)

    def kernel(coords_ref, matches_ref, out_ref):
        # ---- grid-invariant constants, built in-kernel (no constant DMA streams) and
        #      hoisted out of the batch loop.  Channel c = xc*15 + yc.
        c_col = jax.lax.broadcasted_iota(jnp.int32, (NUM_CH, 1), 0).astype(jnp.float32)
        xc = jnp.floor((c_col + 0.5) * (1.0 / H_MATCHES))     # c // 15, rounding-safe
        yc = c_col - H_MATCHES * xc                           # c % 15, exact in f32
        # dilated-identity mask row c is the 0/1 band [max(yc-1,0), min(yc+1,14)] in y
        # (and analogously in x); bilinear sampling of such a band (zeros padding,
        # align_corners=True) at coordinate t is exactly clamp(min(t-(a-1),(b+1)-t),0,1).
        lo_y = jnp.maximum(yc - 1.0, 0.0) - 1.0               # (C, 1)
        hi_y = jnp.minimum(yc + 1.0, H_MATCHES - 1.0) + 1.0
        lo_x = jnp.maximum(xc - 1.0, 0.0) - 1.0
        hi_x = jnp.minimum(xc + 1.0, W_MATCHES - 1.0) + 1.0
        lane = jax.lax.broadcasted_iota(jnp.int32, (8, 128), 1)

        def body(b, acc):
            cb = coords_ref[b]                                 # (2, P)
            iy_r = cb[0:1, :]                                  # (1, P)
            ix_r = cb[1:2, :]                                  # (1, P)
            # warped separable mask, pure VALU -- no MXU, no hat-weight matrices
            wy = jnp.clip(jnp.minimum(iy_r - lo_y, hi_y - iy_r), 0.0, 1.0)   # (C, P)
            wx = jnp.clip(jnp.minimum(ix_r - lo_x, hi_x - ix_r), 0.0, 1.0)   # (C, P)
            score = jnp.sum(wy * wx * matches_ref[b])
            return jnp.where(lane == b, score, acc)            # pack score into lane b

        out_ref[0] = jax.lax.fori_loop(0, bt, body,
                                       jnp.zeros((8, 128), jnp.float32),
                                       unroll=min(2, bt))

    out = pl.pallas_call(
        kernel,
        out_shape=jax.ShapeDtypeStruct((n_blocks, 8, 128), jnp.float32),
        grid_spec=pltpu.PrefetchScalarGridSpec(
            num_scalar_prefetch=0,
            grid=(n_blocks,),
            in_specs=[
                pl.BlockSpec((bt, 2, NUM_PIX), lambda g: (g, 0, 0)),
                pl.BlockSpec((bt, NUM_CH, NUM_PIX), lambda g: (g, 0, 0)),
            ],
            out_specs=pl.BlockSpec((1, 8, 128), lambda g: (g, 0, 0)),
        ),
        compiler_params=pltpu.CompilerParams(
            dimension_semantics=("parallel",)),   # batch blocks independent (v7x 2 TCs)
    )(coords, matches_cp)
    return out[:, 0, :bt].reshape(B)


# ----------------------------------------------------------------------------- module forward
def two_stage_weak_inlier_count(theta_aff, theta_aff_tps, matches):
    # WeakInlierCount.forward with normalize_inlier_count=False, return_outliers=False
    # (module defaults), geometric transform = composed affine + TPS sampling grid.
    comp_grid = composed_sampling_grid(theta_aff, theta_aff_tps)
    return inlier_score_pallas(comp_grid, matches)


def reference_score(theta_aff, theta_aff_tps, matches):
    # dense reference: grid_sample of the full (C, H, W) mask via the 4-corner loop.
    B = matches.shape[0]
    mask_id = build_mask_id()
    comp_grid = composed_sampling_grid(theta_aff, theta_aff_tps)
    mask_b = jnp.broadcast_to(mask_id[None], (B,) + mask_id.shape)
    warped = grid_sample_nchw(mask_b, comp_grid)
    return jnp.sum(warped * matches, axis=(1, 2, 3))


if __name__ == "__main__":
    key = jax.random.PRNGKey(0)
    k1, k2, k3 = jax.random.split(key, 3)
    B = 2

    # near-identity affine: (B, 6) flattened 2x3 [a11 a12 tx a21 a22 ty]
    theta_aff = (jnp.tile(jnp.array([[1., 0., 0., 0., 1., 0.]], jnp.float32), (B, 1))
                 + 0.1 * jax.random.normal(k1, (B, 6), jnp.float32))

    # near-identity TPS: target control points = source control points + noise, (B, 18)
    px, py = control_points()
    theta_id = jnp.concatenate([px, py])[None, :]
    theta_aff_tps = (jnp.tile(theta_id, (B, 1))
                     + 0.05 * jax.random.normal(k2, (B, 2 * N_CTRL), jnp.float32))

    matches = jax.random.normal(k3, (B, NUM_CH, H_MATCHES, W_MATCHES), jnp.float32)

    score = jax.jit(two_stage_weak_inlier_count)(theta_aff, theta_aff_tps, matches)
    jax.block_until_ready(score)

    score_ref = reference_score(theta_aff, theta_aff_tps, matches)
    np.testing.assert_allclose(np.asarray(score), np.asarray(score_ref),
                               rtol=2e-3, atol=1e-2)

    print("KERNEL_OK")
</pallas_src>

<mosaic_0001>
module attributes {stable_mosaic.version = 11 : i64} {
  func.func @kernel(%arg0: i32, %arg1: memref<1x2x225xf32, #tpu.memory_space<vmem>>, %arg2: memref<1x225x225xf32, #tpu.memory_space<vmem>>, %arg3: memref<1x8x128xf32, #tpu.memory_space<vmem>>) attributes {dimension_semantics = [#tpu.dimension_semantics<parallel>], iteration_bounds = array<i64: 2>, scalar_prefetch = 0 : i64, scratch_operands = 0 : i64, tpu.core_type = #tpu.core_type<tc>, window_params = [{transform_indices = @transform_0, window_bounds = array<i64: 1, 2, 225>}, {transform_indices = @transform_1, window_bounds = array<i64: 1, 225, 225>}, {transform_indices = @transform_2, window_bounds = array<i64: 1, 8, 128>}]} {
    %0 = tpu.iota {dimensions = array<i32: 0>} : vector<225x1xi32>
    %1 = arith.sitofp %0 : vector<225x1xi32> to vector<225x1xf32>
    %cst = arith.constant 5.000000e-01 : f32
    %2 = vector.broadcast %cst : f32 to vector<225x1xf32>
    %3 = arith.addf %1, %2 : vector<225x1xf32>
    %cst_0 = arith.constant 0.0666666701 : f32
    %4 = vector.broadcast %cst_0 : f32 to vector<225x1xf32>
    %5 = arith.mulf %3, %4 : vector<225x1xf32>
    %6 = math.floor %5 : vector<225x1xf32>
    %cst_1 = arith.constant 1.500000e+01 : f32
    %7 = vector.broadcast %cst_1 : f32 to vector<225x1xf32>
    %8 = arith.mulf %7, %6 : vector<225x1xf32>
    %9 = arith.subf %1, %8 : vector<225x1xf32>
    %cst_2 = arith.constant 1.000000e+00 : f32
    %10 = vector.broadcast %cst_2 : f32 to vector<225x1xf32>
    %11 = arith.subf %9, %10 : vector<225x1xf32>
    %cst_3 = arith.constant 0.000000e+00 : f32
    %12 = vector.broadcast %cst_3 : f32 to vector<225x1xf32>
    %13 = arith.maximumf %11, %12 : vector<225x1xf32>
    %cst_4 = arith.constant 1.000000e+00 : f32
    %14 = vector.broadcast %cst_4 : f32 to vector<225x1xf32>
    %15 = arith.subf %13, %14 : vector<225x1xf32>
    %cst_5 = arith.constant 1.000000e+00 : f32
    %16 = vector.broadcast %cst_5 : f32 to vector<225x1xf32>
    %17 = arith.addf %9, %16 : vector<225x1xf32>
    %cst_6 = arith.constant 1.400000e+01 : f32
    %18 = vector.broadcast %cst_6 : f32 to vector<225x1xf32>
    %19 = arith.minimumf %17, %18 : vector<225x1xf32>
    %cst_7 = arith.constant 1.000000e+00 : f32
    %20 = vector.broadcast %cst_7 : f32 to vector<225x1xf32>
    %21 = arith.addf %19, %20 : vector<225x1xf32>
    %cst_8 = arith.constant 1.000000e+00 : f32
    %22 = vector.broadcast %cst_8 : f32 to vector<225x1xf32>
    %23 = arith.subf %6, %22 : vector<225x1xf32>
    %cst_9 = arith.constant 0.000000e+00 : f32
    %24 = vector.broadcast %cst_9 : f32 to vector<225x1xf32>
    %25 = arith.maximumf %23, %24 : vector<225x1xf32>
    %cst_10 = arith.constant 1.000000e+00 : f32
    %26 = vector.broadcast %cst_10 : f32 to vector<225x1xf32>
    %27 = arith.subf %25, %26 : vector<225x1xf32>
    %cst_11 = arith.constant 1.000000e+00 : f32
    %28 = vector.broadcast %cst_11 : f32 to vector<225x1xf32>
    %29 = arith.addf %6, %28 : vector<225x1xf32>
    %cst_12 = arith.constant 1.400000e+01 : f32
    %30 = vector.broadcast %cst_12 : f32 to vector<225x1xf32>
    %31 = arith.minimumf %29, %30 : vector<225x1xf32>
    %cst_13 = arith.constant 1.000000e+00 : f32
    %32 = vector.broadcast %cst_13 : f32 to vector<225x1xf32>
    %33 = arith.addf %31, %32 : vector<225x1xf32>
    %34 = tpu.iota {dimensions = array<i32: 1>} : vector<8x128xi32>
    %cst_14 = arith.constant 0.000000e+00 : f32
    %35 = vector.broadcast %cst_14 : f32 to vector<8x128xf32>
    %c0_i32 = arith.constant 0 : i32
    %36 = arith.index_cast %c0_i32 : i32 to index
    %c0 = arith.constant 0 : index
    %c0_15 = arith.constant 0 : index
    %37 = vector.load %arg1[%36, %c0, %c0_15] : memref<1x2x225xf32, #tpu.memory_space<vmem>>, vector<1x2x225xf32>
    %38 = vector.shape_cast %37 : vector<1x2x225xf32> to vector<2x225xf32>
    %39 = vector.extract_strided_slice %38 {offsets = [0, 0], sizes = [1, 225], strides = [1, 1]} : vector<2x225xf32> to vector<1x225xf32>
    %40 = vector.extract_strided_slice %38 {offsets = [1, 0], sizes = [1, 225], strides = [1, 1]} : vector<2x225xf32> to vector<1x225xf32>
    %41 = vector.broadcast %39 : vector<1x225xf32> to vector<225x225xf32>
    %42 = vector.broadcast %15 : vector<225x1xf32> to vector<225x225xf32>
    %43 = arith.subf %41, %42 : vector<225x225xf32>
    %44 = vector.broadcast %21 : vector<225x1xf32> to vector<225x225xf32>
    %45 = vector.broadcast %39 : vector<1x225xf32> to vector<225x225xf32>
    %46 = arith.subf %44, %45 : vector<225x225xf32>
    %47 = arith.minimumf %43, %46 : vector<225x225xf32>
    %cst_16 = arith.constant 0.000000e+00 : f32
    %cst_17 = arith.constant 1.000000e+00 : f32
    %48 = vector.broadcast %cst_16 : f32 to vector<225x225xf32>
    %49 = arith.maximumf %48, %47 : vector<225x225xf32>
    %50 = vector.broadcast %cst_17 : f32 to vector<225x225xf32>
    %51 = arith.minimumf %50, %49 : vector<225x225xf32>
    %52 = vector.broadcast %40 : vector<1x225xf32> to vector<225x225xf32>
    %53 = vector.broadcast %27 : vector<225x1xf32> to vector<225x225xf32>
    %54 = arith.subf %52, %53 : vector<225x225xf32>
    %55 = vector.broadcast %33 : vector<225x1xf32> to vector<225x225xf32>
    %56 = vector.broadcast %40 : vector<1x225xf32> to vector<225x225xf32>
    %57 = arith.subf %55, %56 : vector<225x225xf32>
    %58 = arith.minimumf %54, %57 : vector<225x225xf32>
    %cst_18 = arith.constant 0.000000e+00 : f32
    %cst_19 = arith.constant 1.000000e+00 : f32
    %59 = vector.broadcast %cst_18 : f32 to vector<225x225xf32>
    %60 = arith.maximumf %59, %58 : vector<225x225xf32>
    %61 = vector.broadcast %cst_19 : f32 to vector<225x225xf32>
    %62 = arith.minimumf %61, %60 : vector<225x225xf32>
    %63 = arith.mulf %51, %62 : vector<225x225xf32>
    %64 = arith.index_cast %c0_i32 : i32 to index
    %c0_20 = arith.constant 0 : index
    %c0_21 = arith.constant 0 : index
    %65 = vector.load %arg2[%64, %c0_20, %c0_21] : memref<1x225x225xf32, #tpu.memory_space<vmem>>, vector<1x225x225xf32>
    %66 = vector.shape_cast %65 : vector<1x225x225xf32> to vector<225x225xf32>
    %67 = arith.mulf %63, %66 : vector<225x225xf32>
    %68 = vector.shape_cast %67 : vector<225x225xf32> to vector<1x225x225xf32>
    %cst_22 = arith.constant dense<0.000000e+00> : vector<1xf32>
    %69 = vector.multi_reduction <add>, %68, %cst_22 [1, 2] : vector<1x225x225xf32> to vector<1xf32>
    %70 = vector.shape_cast %69 : vector<1xf32> to vector<1x1x1xf32>
    %71 = vector.extract %70[0, 0, 0] : f32 from vector<1x1x1xf32>
    %72 = vector.broadcast %c0_i32 : i32 to vector<8x128xi32>
    %73 = arith.cmpi eq, %34, %72 : vector<8x128xi32>
    %74 = vector.broadcast %71 : f32 to vector<8x128xf32>
    %75 = arith.select %73, %74, %35 : vector<8x128xi1>, vector<8x128xf32>
    %c1_i32 = arith.constant 1 : i32
    %c0_23 = arith.constant 0 : index
    %c0_24 = arith.constant 0 : index
    %c0_25 = arith.constant 0 : index
    %76 = vector.load %arg3[%c0_23, %c0_24, %c0_25] : memref<1x8x128xf32, #tpu.memory_space<vmem>>, vector<1x8x128xf32>
    %77 = vector.shape_cast %76 : vector<1x8x128xf32> to vector<8x128xf32>
    %78 = vector.shape_cast %75 : vector<8x128xf32> to vector<1x8x128xf32>
    tpu.vector_store %arg3[%c0_23, %c0_24, %c0_25], %78 {strides = array<i32>} : memref<1x8x128xf32, #tpu.memory_space<vmem>>, vector<1x8x128xf32>,
    return
  }
  func.func @transform_0(%arg0: i32) -> (i32, i32, i32) {
    %c0_i32 = arith.constant 0 : i32
    %c0_i32_0 = arith.constant 0 : i32
    %c0_i32_1 = arith.constant 0 : i32
    return %arg0, %c0_i32, %c0_i32_0 : i32, i32, i32
  }
  func.func @transform_1(%arg0: i32) -> (i32, i32, i32) {
    %c0_i32 = arith.constant 0 : i32
    %c0_i32_0 = arith.constant 0 : i32
    %c0_i32_1 = arith.constant 0 : i32
    return %arg0, %c0_i32, %c0_i32_0 : i32, i32, i32
  }
  func.func @transform_2(%arg0: i32) -> (i32, i32, i32) {
    %c0_i32 = arith.constant 0 : i32
    %c0_i32_0 = arith.constant 0 : i32
    %c0_i32_1 = arith.constant 0 : i32
    return %arg0, %c0_i32, %c0_i32_0 : i32, i32, i32
  }
}

</mosaic_0001>

<llo_original>
// kernel: sub.47
$region0: #{sub.47}
  %s0 = inlined_call_operand.vmem [shape: f32[3,3], index: 0, kind: input, shape index: {}]
  %s1 = inlined_call_operand.vmem [shape: f32[9], index: 1, kind: output, shape index: {}]
  $region1: #{sub.47} parent=0
    #allocation0 [shape = 'u8[4096]{0}', space=vmem, size = 0x1000, scoped, tag = 'scoped mem for output reshape']
    #allocation1 [shape = 'u8[4096]{0}', space=vmem, size = 0x1000, scoped, tag = 'scoped mem for input reshape']
    %s3 = sshllo.u32 0, 4
    %v4 = vld [vmem:[%s0] sm:%s3]
    %5 = vst [vmem:[#allocation1] sm:%s3] %v4
    %v6 = vld [vmem:[#allocation1] sm:$0x1]
    %vm7 = vcmask 23552
    %8 = vst.msk [vmem:[#allocation0] sm:$0x1] %vm7, %v6
    %s9 = scalar_lea.vmem [#allocation1], 2
    %v10 = vld [vmem:[%s9] sm:$0x1]
    %11 = vrot.lane.b32.xlu0 %v10, 6
    %v12 = vpop.permute.xlu0 %11
    %vm13 = vcmask 72752
    %14 = vst.msk [vmem:[#allocation0] sm:$0x1] %vm13, %v12
    %s15 = scalar_lea.vmem [#allocation1], 1
    %v16 = vld [vmem:[%s15] sm:$0x1]
    %17 = vrot.lane.b32.xlu0 %v16, 3
    %v18 = vpop.permute.xlu0 %17
    %vm19 = vcmask 48152
    %20 = vst.msk [vmem:[#allocation0] sm:$0x1] %vm19, %v18
    %s22 = sshllo.u32 0, 1
    %v24 = vld [vmem:[#allocation0] sm:%s22]
    %s25 = sshllo.u32 0, 1
    %26 = vst [vmem:[%s1] sm:%s25] %v24

// kernel: custom-call.11
$region0: #{custom-call.11}
  %s0 = inlined_call_operand.vmem [shape: f32[12,12], index: 0, kind: input, shape index: {}]
  %s1 = inlined_call_operand.vmem [shape: f32[12,12], index: 1, kind: output, shape index: {0}]
  %s2 = inlined_call_operand.hbm [shape: s32[12], index: 2, kind: output, shape index: {1}]
  %s3 = inlined_call_operand.vmem [shape: s32[12], index: 3, kind: output, shape index: {2}]
  %4 = xla_tuple %s1, %s2, %s3
  $region1: #{custom-call.11} parent=0
    #allocation0 [shape = 'u8[8192]{0}', space=vmem, size = 0x2000, scoped, tag = 'operand span for operand 0']
    #allocation1 [shape = 'u8[8192]{0}', space=vmem, size = 0x2000, scoped, tag = 'operand span for operand 1']
    #allocation2 [shape = 'u8[4096]{0}', space=vmem, size = 0x1000, scoped, tag = 'operand span for operand 2']
    #allocation3 [shape = 'u8[512]{0}', space=vmem, size = 0x400, scoped, tag = 'packed  for operand 2']
    #allocation4 [shape = 's32[1]{0}', space=sflag, size = 0x4, scoped, tag = 'scoped memory for custom-call.11']
    #allocation5 [shape = 'u8[4096]{0}', space=vmem, size = 0x1000, scoped, tag = 'operand span for operand 3']
    #allocation6 [shape = 'u8[512]{0}', space=vmem, size = 0x400, scoped, tag = 'packed  for operand 3']
    #allocation7 [shape = 's32[12,128]{1,0}', space=vmem, size = 0x2000, scoped, tag = 'scratch for permutations']
    %5 = vsyncpa [#allocation4], 0
    %p7 = scmp.gt.s32.totalorder 16, 0
    // Predicated region
    $region2: #{custom-call.11} parent=1 // pred_check
      %p8 = pneg %p7
    $region3: #{custom-call.11} parent=1 // pred_check_branch
      %10 = sbr.rel (%p8) target = $region5
    $region4: #{custom-call.11} parent=1 // pred_region
      %s11 = sshra.s32 16, 3
      %p12 = scmp.gt.s32.totalorder %s11, 0
      // Predicated region
      $region6: #{custom-call.11} parent=4 // pred_check
        %p13 = pneg %p12
      $region7: #{custom-call.11} parent=4 // pred_check_branch
        %15 = sbr.rel (%p13) target = $region9
      $region8: #{custom-call.11} parent=4 // pred_region
        %s16 = ssub.s32 %s11, 1
        %s17 = smul.u32 %s16, 128
        %s18 = sshra.s32 %s17, 4
        %s19 = scalar_lea.vmem %s0, %s18
        %v20 = vld [vmem:[%s0] sm:$0xff]
        // While loop
        $region10: #{custom-call.11} parent=8 // loop_pre_header
          _
        $region11: #{custom-call.11} parent=8 // loop_header
          %s21 = sphi %s0, %s43
          %s22 = sphi [#allocation0], %s44
          %v23 = vphi %v20, %v45
          %s24 = ssub.s32 %s19, 64
          %p25 = scmp.gt.s32.totalorder %s21, %s24
        $region12: #{custom-call.11} parent=8 // loop_header_branch
          %27 = sbr.rel (%p25) target = $region16
        $region13: #{custom-call.11} parent=8 // loop_body
          %28 = vst [vmem:[%s22] sm:$0xff] %v23
          %v29 = vld [vmem:[%s21 + $0x8] sm:$0xff]
          %30 = vst [vmem:[%s22 + $0x8] sm:$0xff] %v29
          %v31 = vld [vmem:[%s21 + $0x10] sm:$0xff]
          %32 = vst [vmem:[%s22 + $0x10] sm:$0xff] %v31
          %v33 = vld [vmem:[%s21 + $0x18] sm:$0xff]
          %34 = vst [vmem:[%s22 + $0x18] sm:$0xff] %v33
          %v35 = vld [vmem:[%s21 + $0x20] sm:$0xff]
          %36 = vst [vmem:[%s22 + $0x20] sm:$0xff] %v35
          %v37 = vld [vmem:[%s21 + $0x28] sm:$0xff]
          %38 = vst [vmem:[%s22 + $0x28] sm:$0xff] %v37
          %v39 = vld [vmem:[%s21 + $0x30] sm:$0xff]
          %40 = vst [vmem:[%s22 + $0x30] sm:$0xff] %v39
          %v41 = vld [vmem:[%s21 + $0x38] sm:$0xff]
          %42 = vst [vmem:[%s22 + $0x38] sm:$0xff] %v41
        $region14: #{custom-call.11} parent=8 // loop_footer
          %s43 = scalar_lea.vmem %s21, 64
          %s44 = scalar_lea.vmem %s22, 64
          %v45 = vld [vmem:[%s21 + $0x40] sm:$0xff]
        $region15: #{custom-call.11} parent=8 // loop_footer_branch
          %46 = sbr.rel target = $region11
        $region16: #{custom-call.11} parent=8 // loop_exit
          _
        // While loop
        $region17: #{custom-call.11} parent=8 // loop_pre_header
          _
        $region18: #{custom-call.11} parent=8 // loop_header
          %s47 = sphi %s21, %s55
          %s48 = sphi %s22, %s56
          %v49 = vphi %v23, %v49
          %p50 = scmp.gt.s32.totalorder %s47, %s19
        $region19: #{custom-call.11} parent=8 // loop_header_branch
          %52 = sbr.rel (%p50) target = $region23
        $region20: #{custom-call.11} parent=8 // loop_body
          %v53 = vld [vmem:[%s47] sm:$0xff]
          %54 = vst [vmem:[%s48] sm:$0xff] %v53
        $region21: #{custom-call.11} parent=8 // loop_footer
          %s55 = scalar_lea.vmem %s47, 8
          %s56 = scalar_lea.vmem %s48, 8
        $region22: #{custom-call.11} parent=8 // loop_footer_branch
          %57 = sbr.rel target = $region18
        $region23: #{custom-call.11} parent=8 // loop_exit
          _
      $region9: #{custom-call.11} parent=4 // pred_fallthru
        _
      %s58 = sand.u32 16, 7
      %s59 = sshllo.u32 0, %s58
      %s60 = smul.u32 %s11, 128
      %s61 = sshra.s32 %s60, 4
      %s62 = scalar_lea.vmem [#allocation0], %s61
      %s63 = smul.u32 %s11, 128
      %s64 = sshra.s32 %s63, 4
      %s65 = scalar_lea.vmem %s0, %s64
      %v66 = vld [vmem:[%s65] sm:%s59]
      %67 = vst [vmem:[%s62] sm:%s59] %v66
    $region5: #{custom-call.11} parent=1 // pred_fallthru
      _
    %v68 = vld [vmem:[#allocation0] sm:$0xff]
    %69 = vst [vmem:[#allocation1] sm:$0xff] %v68
    %s70 = scalar_lea.vmem [#allocation1], 8
    %s71 = scalar_lea.vmem [#allocation0], 8
    %v72 = vld [vmem:[%s71] sm:$0xff]
    %73 = vst [vmem:[%s70] sm:$0xff] %v72
    %74 = vst [vmem:[#allocation2] sm:$0x1] 0
    %v75 = vlaneseq
    %v76 = vshrl.u32 %v75, 7
    %v77 = vmov %v76
    loop: start=0, step=1, limit=2
    $region24: #{custom-call.11} parent=1 // loop_pre_header
      _
    $region25: #{custom-call.11} parent=1 // loop_header
      %s79 = sphi 0, %s83
      %p80 = scmp.ge.s32.totalorder %s79, 2
    $region26: #{custom-call.11} parent=1 // loop_header_branch
      %82 = sbr.rel (%p80) target = $region30
    $region27: #{custom-call.11} parent=1 // loop_body
      %s84 = smul.addr %s79, 8
      %s85 = scalar_lea.vmem [#allocation7], %s84
      %s86 = smul.u32 %s79, 8
      %v87 = vstv %s86
      %v88 = vadd.s32 %v77, %v87
      %89 = vst [vmem:[%s85] sm:$0xff] %v88
    $region28: #{custom-call.11} parent=1 // loop_footer
      %s83 = sadd.s32 1, %s79
    $region29: #{custom-call.11} parent=1 // loop_footer_branch
      %78 = sbr.rel target = $region25
    $region30: #{custom-call.11} parent=1 // loop_exit
      _
    loop: start=0, step=1, limit=12
    $region31: #{custom-call.11} parent=1 // loop_pre_header
      _
    $region32: #{custom-call.11} parent=1 // loop_header
      %s91 = sphi 0, %s95
      %p92 = scmp.ge.s32.totalorder %s91, 12
    $region33: #{custom-call.11} parent=1 // loop_header_branch
      %94 = sbr.rel (%p92) target = $region37
    $region34: #{custom-call.11} parent=1 // loop_body
      %v96 = vstv %s91
      %v97 = vlaneseq
      %v98 = vshrl.u32 %v97, 7
      %v99 = vmov %v98
      %v100 = vld [vmem:[#allocation1] sm:$0xff]
      %v101 = vand.u32 2147483647, %v100
      %v103 = vstv %s91
      %vm104 = vcmp.ge.s32.totalorder %v99, %v103
      %vm105 = vcmp.lt.s32.totalorder %v99, 12
      %vm106 = vmand %vm104, %vm105
      %vm107 = vcmp.lt.f32.partialorder -inf, %v101
      %vm108 = vmand %vm106, %vm107
      %v109 = vsel %vm108, %v99, %v96
      %v110 = vsel %vm108, %v101, -inf
      %s111 = scalar_lea.vmem [#allocation1], 8
      %v112 = vld [vmem:[%s111] sm:$0xff]
      %v113 = vand.u32 2147483647, %v112
      %v114 = vadd.s32 %v99, 8
      %v115 = vstv %s91
      %vm116 = vcmp.ge.s32.totalorder %v114, %v115
      %vm117 = vcmp.lt.s32.totalorder %v114, 12
      %vm118 = vmand %vm116, %vm117
      %vm119 = vcmp.lt.f32.partialorder %v110, %v113
      %vm120 = vmand %vm118, %vm119
      %v121 = vsel %vm120, %v114, %v109
      %v122 = vsel %vm120, %v113, %v110
      %v123 = vrot.slane %v122, 1
      %v124 = vrot.slane %v121, 1
      %vm125 = vcmp.ge.f32.partialorder %v123, %v122
      %v126 = vsel %vm125, %v123, %v122
      %v127 = vsel %vm125, %v124, %v121
      %v128 = vrot.slane %v123, 1
      %v129 = vrot.slane %v124, 1
      %vm130 = vcmp.ge.f32.partialorder %v128, %v126
      %v131 = vsel %vm130, %v128, %v126
      %v132 = vsel %vm130, %v129, %v127
      %v133 = vrot.slane %v128, 1
      %v134 = vrot.slane %v129, 1
      %vm135 = vcmp.ge.f32.partialorder %v133, %v131
      %v136 = vsel %vm135, %v133, %v131
      %v137 = vsel %vm135, %v134, %v132
      %v138 = vrot.slane %v133, 1
      %v139 = vrot.slane %v134, 1
      %vm140 = vcmp.ge.f32.partialorder %v138, %v136
      %v141 = vsel %vm140, %v138, %v136
      %v142 = vsel %vm140, %v139, %v137
      %v143 = vrot.slane %v138, 1
      %v144 = vrot.slane %v139, 1
      %vm145 = vcmp.ge.f32.partialorder %v143, %v141
      %v146 = vsel %vm145, %v143, %v141
      %v147 = vsel %vm145, %v144, %v142
      %v148 = vrot.slane %v143, 1
      %v149 = vrot.slane %v144, 1
      %vm150 = vcmp.ge.f32.partialorder %v148, %v146
      %v151 = vsel %vm150, %v148, %v146
      %v152 = vsel %vm150, %v149, %v147
      %v153 = vrot.slane %v148, 1
      %v154 = vrot.slane %v149, 1
      %vm155 = vcmp.ge.f32.partialorder %v153, %v151
      %v156 = vsel %vm155, %v153, %v151
      %v157 = vsel %vm155, %v154, %v152
      %s158 = ssub.s32 128, %s91
      %159 = vrot.lane.b32.xlu0 %v157, %s158
      %v160 = vpop.permute.xlu0 %159
      %s161 = vtos %v160
      %v162 = vstv %s91
      %v163 = vlaneseq
      %v164 = vand.u32 %v163, 127
      %vm165 = vcmp.eq.s32.totalorder %v164, %v162
      %v166 = vstv %s161
      %v167 = vld [vmem:[#allocation2] ss:$0 sm:$0xff]
      %v168 = vsel %vm165, %v166, %v167
      %169 = vst [vmem:[#allocation2] sm:$0x1] %v168
      %s170 = scalar_lea.vmem [#allocation1], %s91
      %s171 = scalar_lea.vmem [#allocation1], %s161
      %v172 = vld [vmem:[%s170] ss:$0 sm:$0xff]
      %v173 = vld [vmem:[%s171] ss:$0 sm:$0xff]
      %174 = vst [vmem:[%s171] sm:$0x1] %v172
      %175 = vst [vmem:[%s170] sm:$0x1] %v173
      %s176 = scalar_lea.vmem [#allocation7], %s91
      %s177 = scalar_lea.vmem [#allocation7], %s161
      %v178 = vld [vmem:[%s176] ss:$0 sm:$0xff]
      %v179 = vld [vmem:[%s177] ss:$0 sm:$0xff]
      %180 = vst [vmem:[%s177] sm:$0x1] %v178
      %181 = vst [vmem:[%s176] sm:$0x1] %v179
      %vm182 = vcmp.ne.f32.partialorder %v173, 0.0
      %vm183 = vmand %vm165, %vm182
      %v184 = vsel %vm183, %v173, 1.0
      %v185 = vlaneseq
      %v186 = vand.u32 %v185, 127
      %v187 = vstv %s91
      %vm188 = vcmp.gt.s32.totalorder %v186, %v187
      %v189 = vsel %vm188, %v173, 0.0
      %v190 = vlaneseq
      %v191 = vshrl.u32 %v190, 7
      %v192 = vmov %v191
      %v193 = vld [vmem:[#allocation1] sm:$0xff]
      %v195 = vstv %s91
      %vm196 = vcmp.gt.s32.totalorder %v192, %v195
      %v197 = vsel %vm196, %v184, 1.0
      %v198 = vrcp.pop %v197
      %v199 = vmul.f32 %v193, %v198
      %vm200 = vmand %vm196, %vm165
      %v201 = vsel %vm200, %v199, 0.0
      %202 = vadd.xlane.f32.xlu0 %v201
      %v203 = vpop.xlane.xlu0 %202
      %v204 = vmul.f32 %v203, %v189
      %v205 = vsub.f32 %v199, %v204
      %206 = vst [vmem:[#allocation1] sm:$0xff] %v205
      %s207 = scalar_lea.vmem [#allocation1], 8
      %v208 = vld [vmem:[%s207] sm:$0xff]
      %v209 = vadd.s32 %v192, 8
      %v210 = vstv %s91
      %vm211 = vcmp.gt.s32.totalorder %v209, %v210
      %v212 = vsel %vm211, %v184, 1.0
      %v213 = vrcp.pop %v212
      %v214 = vmul.f32 %v208, %v213
      %vm215 = vmand %vm211, %vm165
      %v216 = vsel %vm215, %v214, 0.0
      %217 = vadd.xlane.f32.xlu0 %v216
      %v218 = vpop.xlane.xlu0 %217
      %v219 = vmul.f32 %v218, %v189
      %v220 = vsub.f32 %v214, %v219
      %221 = vst [vmem:[%s207] sm:$0xff] %v220
    $region35: #{custom-call.11} parent=1 // loop_footer
      %s95 = sadd.s32 1, %s91
    $region36: #{custom-call.11} parent=1 // loop_footer_branch
      %90 = sbr.rel target = $region32
    $region37: #{custom-call.11} parent=1 // loop_exit
      _
    %v222 = vld [vmem:[#allocation7] sm:$0xff]
    %s223 = scalar_lea.vmem [#allocation7], 8
    %v224 = vld [vmem:[%s223] sm:$0xff]
    %s225 = scalar_lea.vmem [#allocation7], 16
    %s226 = scalar_lea.vmem [#allocation7], 24
    %s227 = scalar_lea.vmem [#allocation7], 32
    %s228 = scalar_lea.vmem [#allocation7], 40
    %s229 = scalar_lea.vmem [#allocation7], 48
    %s230 = scalar_lea.vmem [#allocation7], 56
    %s231 = scalar_lea.vmem [#allocation7], 64
    %s232 = scalar_lea.vmem [#allocation7], 72
    %s233 = scalar_lea.vmem [#allocation7], 80
    %s234 = scalar_lea.vmem [#allocation7], 88
    %s235 = scalar_lea.vmem [#allocation7], 96
    %s236 = scalar_lea.vmem [#allocation7], 104
    %s237 = scalar_lea.vmem [#allocation7], 112
    %s238 = scalar_lea.vmem [#allocation7], 120
    %239 = vxpose.xlu0.b32.start [1/16] %v222, 128
    %240 = vxpose.xlu0.b32.cont [2/16] %v224, 128
    %241 = vxpose.xlu0.b32.cont [3/16] 0, 128
    %242 = vxpose.xlu0.b32.cont [4/16] 0, 128
    %243 = vxpose.xlu0.b32.cont [5/16] 0, 128
    %244 = vxpose.xlu0.b32.cont [6/16] 0, 128
    %245 = vxpose.xlu0.b32.cont [7/16] 0, 128
    %246 = vxpose.xlu0.b32.cont [8/16] 0, 128
    %247 = vxpose.xlu0.b32.cont [9/16] 0, 128
    %248 = vxpose.xlu0.b32.cont [10/16] 0, 128
    %249 = vxpose.xlu0.b32.cont [11/16] 0, 128
    %250 = vxpose.xlu0.b32.cont [12/16] 0, 128
    %251 = vxpose.xlu0.b32.cont [13/16] 0, 128
    %252 = vxpose.xlu0.b32.cont [14/16] 0, 128
    %253 = vxpose.xlu0.b32.cont [15/16] 0, 128
    %254 = vxpose.xlu0.b32.end [16/16] 0, 128
    %v255 = vpop.trf.xlu0
    %v256 = vpop.trf.xlu0
    %v257 = vpop.trf.xlu0
    %v258 = vpop.trf.xlu0
    %v259 = vpop.trf.xlu0
    %v260 = vpop.trf.xlu0
    %v261 = vpop.trf.xlu0
    %v262 = vpop.trf.xlu0
    %v263 = vpop.trf.xlu0
    %v264 = vpop.trf.xlu0
    %v265 = vpop.trf.xlu0
    %v266 = vpop.trf.xlu0
    %v267 = vpop.trf.xlu0
    %v268 = vpop.trf.xlu0
    %v269 = vpop.trf.xlu0
    %v270 = vpop.trf.xlu0
    %271 = vst [vmem:[#allocation5] sm:$0x1] %v255
    %s273 = sshllo.u32 0, 1
    %v275 = vld [vmem:[#allocation2] sm:%s273]
    %s276 = sshllo.u32 0, 1
    %277 = vst [vmem:[#allocation3] sm:%s276] %v275
    %s279 = sshllo.u32 0, 1
    %v281 = vld [vmem:[#allocation5] sm:%s279]
    %s282 = sshllo.u32 0, 1
    %283 = vst [vmem:[#allocation6] sm:%s282] %v281
    %p285 = scmp.gt.s32.totalorder 16, 0
    // Predicated region
    $region38: #{custom-call.11} parent=1 // pred_check
      %p286 = pneg %p285
    $region39: #{custom-call.11} parent=1 // pred_check_branch
      %288 = sbr.rel (%p286) target = $region41
    $region40: #{custom-call.11} parent=1 // pred_region
      %s289 = sshra.s32 16, 3
      %p290 = scmp.gt.s32.totalorder %s289, 0
      // Predicated region
      $region42: #{custom-call.11} parent=40 // pred_check
        %p291 = pneg %p290
      $region43: #{custom-call.11} parent=40 // pred_check_branch
        %293 = sbr.rel (%p291) target = $region45
      $region44: #{custom-call.11} parent=40 // pred_region
        %s294 = ssub.s32 %s289, 1
        %s295 = smul.u32 %s294, 128
        %s296 = sshra.s32 %s295, 4
        %s297 = scalar_lea.vmem [#allocation1], %s296
        %v298 = vld [vmem:[#allocation1] sm:$0xff]
        // While loop
        $region46: #{custom-call.11} parent=44 // loop_pre_header
          _
        $region47: #{custom-call.11} parent=44 // loop_header
          %s299 = sphi [#allocation1], %s321
          %s300 = sphi %s1, %s322
          %v301 = vphi %v298, %v323
          %s302 = ssub.s32 %s297, 64
          %p303 = scmp.gt.s32.totalorder %s299, %s302
        $region48: #{custom-call.11} parent=44 // loop_header_branch
          %305 = sbr.rel (%p303) target = $region52
        $region49: #{custom-call.11} parent=44 // loop_body
          %306 = vst [vmem:[%s300] sm:$0xff] %v301
          %v307 = vld [vmem:[%s299 + $0x8] sm:$0xff]
          %308 = vst [vmem:[%s300 + $0x8] sm:$0xff] %v307
          %v309 = vld [vmem:[%s299 + $0x10] sm:$0xff]
          %310 = vst [vmem:[%s300 + $0x10] sm:$0xff] %v309
          %v311 = vld [vmem:[%s299 + $0x18] sm:$0xff]
          %312 = vst [vmem:[%s300 + $0x18] sm:$0xff] %v311
          %v313 = vld [vmem:[%s299 + $0x20] sm:$0xff]
          %314 = vst [vmem:[%s300 + $0x20] sm:$0xff] %v313
          %v315 = vld [vmem:[%s299 + $0x28] sm:$0xff]
          %316 = vst [vmem:[%s300 + $0x28] sm:$0xff] %v315
          %v317 = vld [vmem:[%s299 + $0x30] sm:$0xff]
          %318 = vst [vmem:[%s300 + $0x30] sm:$0xff] %v317
          %v319 = vld [vmem:[%s299 + $0x38] sm:$0xff]
          %320 = vst [vmem:[%s300 + $0x38] sm:$0xff] %v319
        $region50: #{custom-call.11} parent=44 // loop_footer
          %s321 = scalar_lea.vmem %s299, 64
          %s322 = scalar_lea.vmem %s300, 64
          %v323 = vld [vmem:[%s299 + $0x40] sm:$0xff]
        $region51: #{custom-call.11} parent=44 // loop_footer_branch
          %324 = sbr.rel target = $region47
        $region52: #{custom-call.11} parent=44 // loop_exit
          _
        // While loop
        $region53: #{custom-call.11} parent=44 // loop_pre_header
          _
        $region54: #{custom-call.11} parent=44 // loop_header
          %s325 = sphi %s299, %s333
          %s326 = sphi %s300, %s334
          %v327 = vphi %v301, %v327
          %p328 = scmp.gt.s32.totalorder %s325, %s297
        $region55: #{custom-call.11} parent=44 // loop_header_branch
          %330 = sbr.rel (%p328) target = $region59
        $region56: #{custom-call.11} parent=44 // loop_body
          %v331 = vld [vmem:[%s325] sm:$0xff]
          %332 = vst [vmem:[%s326] sm:$0xff] %v331
        $region57: #{custom-call.11} parent=44 // loop_footer
          %s333 = scalar_lea.vmem %s325, 8
          %s334 = scalar_lea.vmem %s326, 8
        $region58: #{custom-call.11} parent=44 // loop_footer_branch
          %335 = sbr.rel target = $region54
        $region59: #{custom-call.11} parent=44 // loop_exit
          _
      $region45: #{custom-call.11} parent=40 // pred_fallthru
        _
      %s336 = sand.u32 16, 7
      %s337 = sshllo.u32 0, %s336
      %s338 = smul.u32 %s289, 128
      %s339 = sshra.s32 %s338, 4
      %s340 = scalar_lea.vmem %s1, %s339
      %s341 = smul.u32 %s289, 128
      %s342 = sshra.s32 %s341, 4
      %s343 = scalar_lea.vmem [#allocation1], %s342
      %v344 = vld [vmem:[%s343] sm:%s337]
      %345 = vst [vmem:[%s340] sm:%s337] %v344
    $region41: #{custom-call.11} parent=1 // pred_fallthru
      _
    // Predicated region
    $region60: #{custom-call.11} parent=1 // pred_check
      _
    $region61: #{custom-call.11} parent=1 // pred_check_branch
      %347 = sbr.rel (0) target = $region63
    $region62: #{custom-call.11} parent=1 // pred_region
      %s349 = ssub.s32 16, 16
      %350 = vsyncadd [#allocation4], %s349
      %s351 = sshll.u32 [#allocation3], 4
      %s352 = int_to_ptr.vmem [resolvable:$true] %s351
      %354 = dma.vmem_to_hbm [thread:$0]  %s352, 16, %s2, [#allocation4]
    $region63: #{custom-call.11} parent=1 // pred_fallthru
      _
    // Predicated region
    $region64: #{custom-call.11} parent=1 // pred_check
      _
    $region65: #{custom-call.11} parent=1 // pred_check_branch
      %356 = sbr.rel (0) target = $region67
    $region66: #{custom-call.11} parent=1 // pred_region
      %p358 = scmp.gt.s32.totalorder 1, 0
      // Predicated region
      $region68: #{custom-call.11} parent=66 // pred_check
        %p359 = pneg %p358
      $region69: #{custom-call.11} parent=66 // pred_check_branch
        %361 = sbr.rel (%p359) target = $region71
      $region70: #{custom-call.11} parent=66 // pred_region
        %s362 = sshra.s32 1, 3
        %p363 = scmp.gt.s32.totalorder %s362, 0
        // Predicated region
        $region72: #{custom-call.11} parent=70 // pred_check
          %p364 = pneg %p363
        $region73: #{custom-call.11} parent=70 // pred_check_branch
          %366 = sbr.rel (%p364) target = $region75
        $region74: #{custom-call.11} parent=70 // pred_region
          %s367 = ssub.s32 %s362, 1
          %s368 = smul.u32 %s367, 128
          %s369 = sshra.s32 %s368, 4
          %s370 = scalar_lea.vmem [#allocation6], %s369
          %v371 = vld [vmem:[#allocation6] sm:$0xff]
          // While loop
          $region76: #{custom-call.11} parent=74 // loop_pre_header
            _
          $region77: #{custom-call.11} parent=74 // loop_header
            %s372 = sphi [#allocation6], %s394
            %s373 = sphi %s3, %s395
            %v374 = vphi %v371, %v396
            %s375 = ssub.s32 %s370, 64
            %p376 = scmp.gt.s32.totalorder %s372, %s375
          $region78: #{custom-call.11} parent=74 // loop_header_branch
            %378 = sbr.rel (%p376) target = $region82
          $region79: #{custom-call.11} parent=74 // loop_body
            %379 = vst [vmem:[%s373] sm:$0xff] %v374
            %v380 = vld [vmem:[%s372 + $0x8] sm:$0xff]
            %381 = vst [vmem:[%s373 + $0x8] sm:$0xff] %v380
            %v382 = vld [vmem:[%s372 + $0x10] sm:$0xff]
            %383 = vst [vmem:[%s373 + $0x10] sm:$0xff] %v382
            %v384 = vld [vmem:[%s372 + $0x18] sm:$0xff]
            %385 = vst [vmem:[%s373 + $0x18] sm:$0xff] %v384
            %v386 = vld [vmem:[%s372 + $0x20] sm:$0xff]
            %387 = vst [vmem:[%s373 + $0x20] sm:$0xff] %v386
            %v388 = vld [vmem:[%s372 + $0x28] sm:$0xff]
            %389 = vst [vmem:[%s373 + $0x28] sm:$0xff] %v388
            %v390 = vld [vmem:[%s372 + $0x30] sm:$0xff]
            %391 = vst [vmem:[%s373 + $0x30] sm:$0xff] %v390
            %v392 = vld [vmem:[%s372 + $0x38] sm:$0xff]
            %393 = vst [vmem:[%s373 + $0x38] sm:$0xff] %v392
          $region80: #{custom-call.11} parent=74 // loop_footer
            %s394 = scalar_lea.vmem %s372, 64
            %s395 = scalar_lea.vmem %s373, 64
            %v396 = vld [vmem:[%s372 + $0x40] sm:$0xff]
          $region81: #{custom-call.11} parent=74 // loop_footer_branch
            %397 = sbr.rel target = $region77
          $region82: #{custom-call.11} parent=74 // loop_exit
            _
          // While loop
          $region83: #{custom-call.11} parent=74 // loop_pre_header
            _
          $region84: #{custom-call.11} parent=74 // loop_header
            %s398 = sphi %s372, %s406
            %s399 = sphi %s373, %s407
            %v400 = vphi %v374, %v400
            %p401 = scmp.gt.s32.totalorder %s398, %s370
          $region85: #{custom-call.11} parent=74 // loop_header_branch
            %403 = sbr.rel (%p401) target = $region89
          $region86: #{custom-call.11} parent=74 // loop_body
            %v404 = vld [vmem:[%s398] sm:$0xff]
            %405 = vst [vmem:[%s399] sm:$0xff] %v404
          $region87: #{custom-call.11} parent=74 // loop_footer
            %s406 = scalar_lea.vmem %s398, 8
            %s407 = scalar_lea.vmem %s399, 8
          $region88: #{custom-call.11} parent=74 // loop_footer_branch
            %408 = sbr.rel target = $region84
          $region89: #{custom-call.11} parent=74 // loop_exit
            _
        $region75: #{custom-call.11} parent=70 // pred_fallthru
          _
        %s409 = sand.u32 1, 7
        %s410 = sshllo.u32 0, %s409
        %s411 = smul.u32 %s362, 128
        %s412 = sshra.s32 %s411, 4
        %s413 = scalar_lea.vmem %s3, %s412
        %s414 = smul.u32 %s362, 128
        %s415 = sshra.s32 %s414, 4
        %s416 = scalar_lea.vmem [#allocation6], %s415
        %v417 = vld [vmem:[%s416] sm:%s410]
        %418 = vst [vmem:[%s413] sm:%s410] %v417
      $region71: #{custom-call.11} parent=66 // pred_fallthru
        _
    $region67: #{custom-call.11} parent=1 // pred_fallthru
      _
    // Predicated region
    $region90: #{custom-call.11} parent=1 // pred_check
      _
    $region91: #{custom-call.11} parent=1 // pred_check_branch
      %420 = sbr.rel (0) target = $region93
    $region92: #{custom-call.11} parent=1 // pred_region
      %421 = dma.done [#allocation4], 16
    $region93: #{custom-call.11} parent=1 // pred_fallthru
      _
    // Predicated region
    $region94: #{custom-call.11} parent=1 // pred_check
      _
    $region95: #{custom-call.11} parent=1 // pred_check_branch
      %423 = sbr.rel (0) target = $region97
    $region96: #{custom-call.11} parent=1 // pred_region
      _
    $region97: #{custom-call.11} parent=1 // pred_fallthru
      _
    %424 = vsyncpa [#allocation4], 1

// kernel: custom-call.12
$region0: #{custom-call.12}
  %s0 = inlined_call_operand.vmem [shape: f32[1,12,12], index: 0, kind: input, shape index: {}]
  %s1 = inlined_call_operand.vmem [shape: f32[1,12,12], index: 1, kind: output, shape index: {}]
  $region1: #{custom-call.12} parent=0
    #allocation0 [shape = 'u8[8192]{0}', space=vmem, size = 0x2000, scoped, tag = 'operand span for operand 0']
    #allocation1 [shape = 'u8[8192]{0}', space=vmem, size = 0x2000, scoped, tag = 'operand span for operand 1']
    #allocation2 [shape = 'f32[12,12]{1,0}', space=vmem, size = 0x2000, scoped, tag = 'rescaled input a']
    // Predicated region
    $region2: #{custom-call.12} parent=1 // pred_check
      _
    $region3: #{custom-call.12} parent=1 // pred_check_branch
      %3 = sbr.rel (0) target = $region5
    $region4: #{custom-call.12} parent=1 // pred_region
      // Predicated region
      $region6: #{custom-call.12} parent=4 // pred_check
        _
      $region7: #{custom-call.12} parent=4 // pred_check_branch
        %5 = sbr.rel (0) target = $region9
      $region8: #{custom-call.12} parent=4 // pred_region
        // Predicated region
        $region21: #{custom-call.12} parent=8 // pred_check
          _
        $region22: #{custom-call.12} parent=8 // pred_check_branch
          %22 = sbr.rel (0) target = $region24
        $region23: #{custom-call.12} parent=8 // pred_region
          loop: start=0, step=1, limit=1
          $region25: #{custom-call.12} parent=23 // loop_pre_header
            _
          $region26: #{custom-call.12} parent=23 // loop_header
            %s24 = sphi 0, %s28
            %p25 = scmp.ge.s32.totalorder %s24, 1
            %s29 = sphi %s0, %s0
            %s30 = sphi [#allocation0], [#allocation0]
          $region27: #{custom-call.12} parent=23 // loop_header_branch
            %27 = sbr.rel (%p25) target = $region31
          $region28: #{custom-call.12} parent=23 // loop_body
            %v31 = vld [vmem:[%s29] sm:$0xff]
            %32 = vst [vmem:[%s30] sm:$0xff] %v31
            %v33 = vld [vmem:[%s29 + $0x8] sm:$0xff]
            %34 = vst [vmem:[%s30 + $0x8] sm:$0xff] %v33
          $region29: #{custom-call.12} parent=23 // loop_footer
            %s28 = sadd.s32 1, %s24
          $region30: #{custom-call.12} parent=23 // loop_footer_branch
            %23 = sbr.rel target = $region26
          $region31: #{custom-call.12} parent=23 // loop_exit
            _
        $region24: #{custom-call.12} parent=8 // pred_fallthru
          _
        // Predicated region
        $region32: #{custom-call.12} parent=8 // pred_check
          _
        $region33: #{custom-call.12} parent=8 // pred_check_branch
          %36 = sbr.rel target = $region35
        $region34: #{custom-call.12} parent=8 // pred_region
          _
        $region35: #{custom-call.12} parent=8 // pred_fallthru
          _
      $region9: #{custom-call.12} parent=4 // pred_fallthru
        _
      // Predicated region
      $region10: #{custom-call.12} parent=4 // pred_check
        _
      $region11: #{custom-call.12} parent=4 // pred_check_branch
        %7 = sbr.rel target = $region13
      $region12: #{custom-call.12} parent=4 // pred_region
        loop: start=0, step=1, limit=1
        $region14: #{custom-call.12} parent=12 // loop_pre_header
          _
        $region15: #{custom-call.12} parent=12 // loop_header
          %s10 = sphi 0, %s14
          %p11 = scmp.ge.s32.totalorder %s10, 1
          %s15 = sphi %s0, %s0
          %s16 = sphi [#allocation0], [#allocation0]
        $region16: #{custom-call.12} parent=12 // loop_header_branch
          %13 = sbr.rel (%p11) target = $region20
        $region17: #{custom-call.12} parent=12 // loop_body
          %v17 = vld [vmem:[%s15] sm:$0xff]
          %18 = vst [vmem:[%s16] sm:$0xff] %v17
          %v19 = vld [vmem:[%s15 + $0x8] sm:$0xff]
          %20 = vst [vmem:[%s16 + $0x8] sm:$0xff] %v19
        $region18: #{custom-call.12} parent=12 // loop_footer
          %s14 = sadd.s32 1, %s10
        $region19: #{custom-call.12} parent=12 // loop_footer_branch
          %9 = sbr.rel target = $region15
        $region20: #{custom-call.12} parent=12 // loop_exit
          _
      $region13: #{custom-call.12} parent=4 // pred_fallthru
        _
    $region5: #{custom-call.12} parent=1 // pred_fallthru
      _
    %37 = vnop
    %v38 = vlaneseq
    %v39 = vand.u32 %v38, 127
    %vm40 = vcmp.lt.s32.totalorder %v39, 12
    %v41 = vlaneseq
    %v42 = vshrl.u32 %v41, 7
    %vm44 = vcmp.eq.s32.totalorder %v42, %v39
    %v45 = vld [vmem:[#allocation0] sm:$0xff]
    %v46 = vsel %vm44, %v45, 0.0
    %47 = vadd.xlane.f32.xlu0 %v46
    %v48 = vpop.xlane.xlu0 %47
    %vm49 = vcmp.le.s32.totalorder %v42, %v39
    %vm50 = vmand %vm49, %vm40
    %v51 = vsel %vm50, %v45, 0.0
    %v52 = vrcp.pop %v48
    %v53 = vmul.f32 %v51, %v52
    %54 = vst [vmem:[#allocation2] sm:$0xff] %v53
    %s55 = scalar_lea.vmem [#allocation0], 8
    %s56 = scalar_lea.vmem [#allocation2], 8
    %v57 = vlaneseq
    %v58 = vshrl.u32 %v57, 7
    %v59 = vadd.s32 %v58, 8
    %vm60 = vcmp.eq.s32.totalorder %v59, %v39
    %v61 = vld [vmem:[%s55] sm:$0xff]
    %v62 = vsel %vm60, %v61, 0.0
    %63 = vadd.xlane.f32.xlu0 %v62
    %v64 = vpop.xlane.xlu0 %63
    %vm65 = vcmp.le.s32.totalorder %v59, %v39
    %vm66 = vmand %vm65, %vm40
    %v67 = vsel %vm66, %v61, 0.0
    %v68 = vrcp.pop %v64
    %v69 = vmul.f32 %v67, %v68
    %70 = vst [vmem:[%s56] sm:$0xff] %v69
    %v71 = vlaneseq
    %v72 = vand.u32 %v71, 127
    %v73 = vlaneseq
    %v74 = vshrl.u32 %v73, 7
    %vm76 = vcmp.eq.s32.totalorder %v72, %v74
    %v77 = vsel %vm76, -1.0, 0.0
    %v78 = vlaneseq
    %v79 = vand.u32 %v78, 127
    %v80 = vlaneseq
    %v81 = vshrl.u32 %v80, 7
    %v82 = vadd.s32 %v81, 8
    %vm83 = vcmp.eq.s32.totalorder %v79, %v82
    %v84 = vlaneseq
    %v85 = vand.u32 %v84, 127
    %vm86 = vcmp.eq.s32.totalorder %v85, 11
    %v87 = vsel %vm86, 1.0, -1.0
    %v88 = vsel %vm83, %v87, 0.0
    %s89 = scalar_lea.vmem [#allocation2], 10
    %v90 = vld [vmem:[%s89] ss:$0 sm:$0xff]
    %v91 = vxor.u32 %v90, 2147483648
    %v92 = vlaneseq
    %v93 = vand.u32 %v92, 127
    %vm94 = vcmp.eq.s32.totalorder %v93, 10
    %v95 = vmul.f32 %v91, %v88
    %96 = vadd.xlane.f32.xlu0 %v95
    %v97 = vpop.xlane.xlu0 %96
    %v98 = vsel %vm94, %v97, %v88
    %s99 = scalar_lea.vmem [#allocation2], 9
    %v100 = vld [vmem:[%s99] ss:$0 sm:$0xff]
    %v101 = vxor.u32 %v100, 2147483648
    %v102 = vlaneseq
    %v103 = vand.u32 %v102, 127
    %vm104 = vcmp.eq.s32.totalorder %v103, 9
    %v105 = vmul.f32 %v101, %v98
    %106 = vadd.xlane.f32.xlu0 %v105
    %v107 = vpop.xlane.xlu0 %106
    %v108 = vsel %vm104, %v107, %v98
    %s109 = scalar_lea.vmem [#allocation2], 8
    %v110 = vld [vmem:[%s109] ss:$0 sm:$0xff]
    %v111 = vxor.u32 %v110, 2147483648
    %v112 = vlaneseq
    %v113 = vand.u32 %v112, 127
    %vm114 = vcmp.eq.s32.totalorder %v113, 8
    %v115 = vmul.f32 %v111, %v108
    %116 = vadd.xlane.f32.xlu0 %v115
    %v117 = vpop.xlane.xlu0 %116
    %v118 = vsel %vm114, %v117, %v108
    %s119 = scalar_lea.vmem [#allocation2], 7
    %v120 = vld [vmem:[%s119] ss:$0 sm:$0xff]
    %v121 = vxor.u32 %v120, 2147483648
    %v122 = vlaneseq
    %v123 = vand.u32 %v122, 127
    %vm124 = vcmp.eq.s32.totalorder %v123, 7
    %v125 = vmul.f32 %v121, %v77
    %126 = vadd.xlane.f32.xlu0 %v125
    %v127 = vpop.xlane.xlu0 %126
    %v128 = vsel %vm124, %v127, %v77
    %v129 = vmul.f32 %v121, %v118
    %130 = vadd.xlane.f32.xlu0 %v129
    %v131 = vpop.xlane.xlu0 %130
    %v132 = vsel %vm124, %v131, %v118
    %s133 = scalar_lea.vmem [#allocation2], 6
    %v134 = vld [vmem:[%s133] ss:$0 sm:$0xff]
    %v135 = vxor.u32 %v134, 2147483648
    %v136 = vlaneseq
    %v137 = vand.u32 %v136, 127
    %vm138 = vcmp.eq.s32.totalorder %v137, 6
    %v139 = vmul.f32 %v135, %v128
    %140 = vadd.xlane.f32.xlu0 %v139
    %v141 = vpop.xlane.xlu0 %140
    %v142 = vsel %vm138, %v141, %v128
    %v143 = vmul.f32 %v135, %v132
    %144 = vadd.xlane.f32.xlu0 %v143
    %v145 = vpop.xlane.xlu0 %144
    %v146 = vsel %vm138, %v145, %v132
    %s147 = scalar_lea.vmem [#allocation2], 5
    %v148 = vld [vmem:[%s147] ss:$0 sm:$0xff]
    %v149 = vxor.u32 %v148, 2147483648
    %v150 = vlaneseq
    %v151 = vand.u32 %v150, 127
    %vm152 = vcmp.eq.s32.totalorder %v151, 5
    %v153 = vmul.f32 %v149, %v142
    %154 = vadd.xlane.f32.xlu0 %v153
    %v155 = vpop.xlane.xlu0 %154
    %v156 = vsel %vm152, %v155, %v142
    %v157 = vmul.f32 %v149, %v146
    %158 = vadd.xlane.f32.xlu0 %v157
    %v159 = vpop.xlane.xlu0 %158
    %v160 = vsel %vm152, %v159, %v146
    %s161 = scalar_lea.vmem [#allocation2], 4
    %v162 = vld [vmem:[%s161] ss:$0 sm:$0xff]
    %v163 = vxor.u32 %v162, 2147483648
    %v164 = vlaneseq
    %v165 = vand.u32 %v164, 127
    %vm166 = vcmp.eq.s32.totalorder %v165, 4
    %v167 = vmul.f32 %v163, %v156
    %168 = vadd.xlane.f32.xlu0 %v167
    %v169 = vpop.xlane.xlu0 %168
    %v170 = vsel %vm166, %v169, %v156
    %v171 = vmul.f32 %v163, %v160
    %172 = vadd.xlane.f32.xlu0 %v171
    %v173 = vpop.xlane.xlu0 %172
    %v174 = vsel %vm166, %v173, %v160
    %s175 = scalar_lea.vmem [#allocation2], 3
    %v176 = vld [vmem:[%s175] ss:$0 sm:$0xff]
    %v177 = vxor.u32 %v176, 2147483648
    %v178 = vlaneseq
    %v179 = vand.u32 %v178, 127
    %vm180 = vcmp.eq.s32.totalorder %v179, 3
    %v181 = vmul.f32 %v177, %v170
    %182 = vadd.xlane.f32.xlu0 %v181
    %v183 = vpop.xlane.xlu0 %182
    %v184 = vsel %vm180, %v183, %v170
    %v185 = vmul.f32 %v177, %v174
    %186 = vadd.xlane.f32.xlu0 %v185
    %v187 = vpop.xlane.xlu0 %186
    %v188 = vsel %vm180, %v187, %v174
    %s189 = scalar_lea.vmem [#allocation2], 2
    %v190 = vld [vmem:[%s189] ss:$0 sm:$0xff]
    %v191 = vxor.u32 %v190, 2147483648
    %v192 = vlaneseq
    %v193 = vand.u32 %v192, 127
    %vm194 = vcmp.eq.s32.totalorder %v193, 2
    %v195 = vmul.f32 %v191, %v184
    %196 = vadd.xlane.f32.xlu0 %v195
    %v197 = vpop.xlane.xlu0 %196
    %v198 = vsel %vm194, %v197, %v184
    %v199 = vmul.f32 %v191, %v188
    %200 = vadd.xlane.f32.xlu0 %v199
    %v201 = vpop.xlane.xlu0 %200
    %v202 = vsel %vm194, %v201, %v188
    %s203 = scalar_lea.vmem [#allocation2], 1
    %v204 = vld [vmem:[%s203] ss:$0 sm:$0xff]
    %v205 = vxor.u32 %v204, 2147483648
    %v206 = vlaneseq
    %v207 = vand.u32 %v206, 127
    %vm208 = vcmp.eq.s32.totalorder %v207, 1
    %v209 = vmul.f32 %v205, %v198
    %210 = vadd.xlane.f32.xlu0 %v209
    %v211 = vpop.xlane.xlu0 %210
    %v212 = vsel %vm208, %v211, %v198
    %v213 = vmul.f32 %v205, %v202
    %214 = vadd.xlane.f32.xlu0 %v213
    %v215 = vpop.xlane.xlu0 %214
    %v216 = vsel %vm208, %v215, %v202
    %v217 = vld [vmem:[#allocation2] ss:$0 sm:$0xff]
    %v218 = vxor.u32 %v217, 2147483648
    %v219 = vlaneseq
    %v220 = vand.u32 %v219, 127
    %vm221 = vcmp.eq.s32.totalorder %v220, 0
    %v222 = vmul.f32 %v218, %v212
    %223 = vadd.xlane.f32.xlu0 %v222
    %v224 = vpop.xlane.xlu0 %223
    %v225 = vsel %vm221, %v224, %v212
    %v226 = vmul.f32 %v218, %v216
    %227 = vadd.xlane.f32.xlu0 %v226
    %v228 = vpop.xlane.xlu0 %227
    %v229 = vsel %vm221, %v228, %v216
    %v230 = vrcp.pop %v48
    %v231 = vmul.f32 %v225, %v230
    %vm232 = vweird.f32 %v48
    %v233 = vsel %vm232, %v225, %v231
    %234 = vst [vmem:[#allocation1] sm:$0xff] %v233
    %v235 = vrcp.pop %v64
    %v236 = vmul.f32 %v229, %v235
    %vm237 = vweird.f32 %v64
    %v238 = vsel %vm237, %v229, %v236
    %s239 = scalar_lea.vmem [#allocation1], 8
    %240 = vst [vmem:[%s239] sm:$0xff] %v238
    // Predicated region
    $region36: #{custom-call.12} parent=1 // pred_check
      _
    $region37: #{custom-call.12} parent=1 // pred_check_branch
      %242 = sbr.rel (0) target = $region39
    $region38: #{custom-call.12} parent=1 // pred_region
      // Predicated region
      $region40: #{custom-call.12} parent=38 // pred_check
        _
      $region41: #{custom-call.12} parent=38 // pred_check_branch
        %244 = sbr.rel (0) target = $region43
      $region42: #{custom-call.12} parent=38 // pred_region
        // Predicated region
        $region55: #{custom-call.12} parent=42 // pred_check
          _
        $region56: #{custom-call.12} parent=42 // pred_check_branch
          %261 = sbr.rel (0) target = $region58
        $region57: #{custom-call.12} parent=42 // pred_region
          loop: start=0, step=1, limit=1
          $region59: #{custom-call.12} parent=57 // loop_pre_header
            _
          $region60: #{custom-call.12} parent=57 // loop_header
            %s263 = sphi 0, %s267
            %p264 = scmp.ge.s32.totalorder %s263, 1
            %s268 = sphi [#allocation1], [#allocation1]
            %s269 = sphi %s1, %s1
          $region61: #{custom-call.12} parent=57 // loop_header_branch
            %266 = sbr.rel (%p264) target = $region65
          $region62: #{custom-call.12} parent=57 // loop_body
            %v270 = vld [vmem:[%s268] sm:$0xff]
            %271 = vst [vmem:[%s269] sm:$0xff] %v270
            %v272 = vld [vmem:[%s268 + $0x8] sm:$0xff]
            %273 = vst [vmem:[%s269 + $0x8] sm:$0xff] %v272
          $region63: #{custom-call.12} parent=57 // loop_footer
            %s267 = sadd.s32 1, %s263
          $region64: #{custom-call.12} parent=57 // loop_footer_branch
            %262 = sbr.rel target = $region60
          $region65: #{custom-call.12} parent=57 // loop_exit
            _
        $region58: #{custom-call.12} parent=42 // pred_fallthru
          _
        // Predicated region
        $region66: #{custom-call.12} parent=42 // pred_check
          _
        $region67: #{custom-call.12} parent=42 // pred_check_branch
          %275 = sbr.rel target = $region69
        $region68: #{custom-call.12} parent=42 // pred_region
          _
        $region69: #{custom-call.12} parent=42 // pred_fallthru
          _
      $region43: #{custom-call.12} parent=38 // pred_fallthru
        _
      // Predicated region
      $region44: #{custom-call.12} parent=38 // pred_check
        _
      $region45: #{custom-call.12} parent=38 // pred_check_branch
        %246 = sbr.rel target = $region47
      $region46: #{custom-call.12} parent=38 // pred_region
        loop: start=0, step=1, limit=1
        $region48: #{custom-call.12} parent=46 // loop_pre_header
          _
        $region49: #{custom-call.12} parent=46 // loop_header
          %s249 = sphi 0, %s253
          %p250 = scmp.ge.s32.totalorder %s249, 1
          %s254 = sphi [#allocation1], [#allocation1]
          %s255 = sphi %s1, %s1
        $region50: #{custom-call.12} parent=46 // loop_header_branch
          %252 = sbr.rel (%p250) target = $region54
        $region51: #{custom-call.12} parent=46 // loop_body
          %v256 = vld [vmem:[%s254] sm:$0xff]
          %257 = vst [vmem:[%s255] sm:$0xff] %v256
          %v258 = vld [vmem:[%s254 + $0x8] sm:$0xff]
          %259 = vst [vmem:[%s255 + $0x8] sm:$0xff] %v258
        $region52: #{custom-call.12} parent=46 // loop_footer
          %s253 = sadd.s32 1, %s249
        $region53: #{custom-call.12} parent=46 // loop_footer_branch
          %248 = sbr.rel target = $region49
        $region54: #{custom-call.12} parent=46 // loop_exit
          _
      $region47: #{custom-call.12} parent=38 // pred_fallthru
        _
    $region39: #{custom-call.12} parent=1 // pred_fallthru
      _
    %276 = vnop

// kernel: custom-call.13
$region0: #{custom-call.13}
  %s0 = inlined_call_operand.vmem [shape: f32[1,12,12], index: 0, kind: input, shape index: {}]
  %s1 = inlined_call_operand.vmem [shape: f32[1,12,12], index: 1, kind: output, shape index: {}]
  $region1: #{custom-call.13} parent=0
    #allocation0 [shape = 'u8[8192]{0}', space=vmem, size = 0x2000, scoped, tag = 'operand span for operand 0']
    #allocation1 [shape = 'u8[8192]{0}', space=vmem, size = 0x2000, scoped, tag = 'operand span for operand 1']
    #allocation2 [shape = 'f32[12,12]{1,0}', space=vmem, size = 0x2000, scoped, tag = 'rescaled input a']
    // Predicated region
    $region2: #{custom-call.13} parent=1 // pred_check
      _
    $region3: #{custom-call.13} parent=1 // pred_check_branch
      %3 = sbr.rel (0) target = $region5
    $region4: #{custom-call.13} parent=1 // pred_region
      // Predicated region
      $region6: #{custom-call.13} parent=4 // pred_check
        _
      $region7: #{custom-call.13} parent=4 // pred_check_branch
        %5 = sbr.rel (0) target = $region9
      $region8: #{custom-call.13} parent=4 // pred_region
        // Predicated region
        $region21: #{custom-call.13} parent=8 // pred_check
          _
        $region22: #{custom-call.13} parent=8 // pred_check_branch
          %22 = sbr.rel (0) target = $region24
        $region23: #{custom-call.13} parent=8 // pred_region
          loop: start=0, step=1, limit=1
          $region25: #{custom-call.13} parent=23 // loop_pre_header
            _
          $region26: #{custom-call.13} parent=23 // loop_header
            %s24 = sphi 0, %s28
            %p25 = scmp.ge.s32.totalorder %s24, 1
            %s29 = sphi %s0, %s0
            %s30 = sphi [#allocation0], [#allocation0]
          $region27: #{custom-call.13} parent=23 // loop_header_branch
            %27 = sbr.rel (%p25) target = $region31
          $region28: #{custom-call.13} parent=23 // loop_body
            %v31 = vld [vmem:[%s29] sm:$0xff]
            %32 = vst [vmem:[%s30] sm:$0xff] %v31
            %v33 = vld [vmem:[%s29 + $0x8] sm:$0xff]
            %34 = vst [vmem:[%s30 + $0x8] sm:$0xff] %v33
          $region29: #{custom-call.13} parent=23 // loop_footer
            %s28 = sadd.s32 1, %s24
          $region30: #{custom-call.13} parent=23 // loop_footer_branch
            %23 = sbr.rel target = $region26
          $region31: #{custom-call.13} parent=23 // loop_exit
            _
        $region24: #{custom-call.13} parent=8 // pred_fallthru
          _
        // Predicated region
        $region32: #{custom-call.13} parent=8 // pred_check
          _
        $region33: #{custom-call.13} parent=8 // pred_check_branch
          %36 = sbr.rel target = $region35
        $region34: #{custom-call.13} parent=8 // pred_region
          _
        $region35: #{custom-call.13} parent=8 // pred_fallthru
          _
      $region9: #{custom-call.13} parent=4 // pred_fallthru
        _
      // Predicated region
      $region10: #{custom-call.13} parent=4 // pred_check
        _
      $region11: #{custom-call.13} parent=4 // pred_check_branch
        %7 = sbr.rel target = $region13
      $region12: #{custom-call.13} parent=4 // pred_region
        loop: start=0, step=1, limit=1
        $region14: #{custom-call.13} parent=12 // loop_pre_header
          _
        $region15: #{custom-call.13} parent=12 // loop_header
          %s10 = sphi 0, %s14
          %p11 = scmp.ge.s32.totalorder %s10, 1
          %s15 = sphi %s0, %s0
          %s16 = sphi [#allocation0], [#allocation0]
        $region16: #{custom-call.13} parent=12 // loop_header_branch
          %13 = sbr.rel (%p11) target = $region20
        $region17: #{custom-call.13} parent=12 // loop_body
          %v17 = vld [vmem:[%s15] sm:$0xff]
          %18 = vst [vmem:[%s16] sm:$0xff] %v17
          %v19 = vld [vmem:[%s15 + $0x8] sm:$0xff]
          %20 = vst [vmem:[%s16 + $0x8] sm:$0xff] %v19
        $region18: #{custom-call.13} parent=12 // loop_footer
          %s14 = sadd.s32 1, %s10
        $region19: #{custom-call.13} parent=12 // loop_footer_branch
          %9 = sbr.rel target = $region15
        $region20: #{custom-call.13} parent=12 // loop_exit
          _
      $region13: #{custom-call.13} parent=4 // pred_fallthru
        _
    $region5: #{custom-call.13} parent=1 // pred_fallthru
      _
    %37 = vnop
    %v38 = vlaneseq
    %v39 = vand.u32 %v38, 127
    %vm40 = vcmp.lt.s32.totalorder %v39, 12
    %v41 = vlaneseq
    %v42 = vshrl.u32 %v41, 7
    %vm44 = vcmp.eq.s32.totalorder %v42, %v39
    %v45 = vld [vmem:[#allocation0] sm:$0xff]
    %v46 = vsel %vm44, %v45, 0.0
    %47 = vadd.xlane.f32.xlu0 %v46
    %v48 = vpop.xlane.xlu0 %47
    %vm49 = vcmp.ge.s32.totalorder %v42, %v39
    %vm50 = vmand %vm49, %vm40
    %v51 = vsel %vm50, %v45, 0.0
    %v52 = vrcp.pop %v48
    %v53 = vmul.f32 %v51, %v52
    %54 = vst [vmem:[#allocation2] sm:$0xff] %v53
    %s55 = scalar_lea.vmem [#allocation0], 8
    %s56 = scalar_lea.vmem [#allocation2], 8
    %v57 = vlaneseq
    %v58 = vshrl.u32 %v57, 7
    %v59 = vadd.s32 %v58, 8
    %vm60 = vcmp.eq.s32.totalorder %v59, %v39
    %v61 = vld [vmem:[%s55] sm:$0xff]
    %v62 = vsel %vm60, %v61, 0.0
    %63 = vadd.xlane.f32.xlu0 %v62
    %v64 = vpop.xlane.xlu0 %63
    %vm65 = vcmp.ge.s32.totalorder %v59, %v39
    %vm66 = vmand %vm65, %vm40
    %v67 = vsel %vm66, %v61, 0.0
    %v68 = vrcp.pop %v64
    %v69 = vmul.f32 %v67, %v68
    %70 = vst [vmem:[%s56] sm:$0xff] %v69
    %v71 = vlaneseq
    %v72 = vand.u32 %v71, 127
    %v73 = vlaneseq
    %v74 = vshrl.u32 %v73, 7
    %vm76 = vcmp.eq.s32.totalorder %v72, %v74
    %v77 = vlaneseq
    %v78 = vand.u32 %v77, 127
    %vm79 = vcmp.eq.s32.totalorder %v78, 0
    %v80 = vsel %vm79, 1.0, -1.0
    %v81 = vsel %vm76, %v80, 0.0
    %v82 = vlaneseq
    %v83 = vand.u32 %v82, 127
    %v84 = vlaneseq
    %v85 = vshrl.u32 %v84, 7
    %v86 = vadd.s32 %v85, 8
    %vm87 = vcmp.eq.s32.totalorder %v83, %v86
    %v88 = vsel %vm87, -1.0, 0.0
    %s89 = scalar_lea.vmem [#allocation2], 1
    %v90 = vld [vmem:[%s89] ss:$0 sm:$0xff]
    %v91 = vxor.u32 %v90, 2147483648
    %v92 = vlaneseq
    %v93 = vand.u32 %v92, 127
    %vm94 = vcmp.eq.s32.totalorder %v93, 1
    %v95 = vmul.f32 %v91, %v81
    %96 = vadd.xlane.f32.xlu0 %v95
    %v97 = vpop.xlane.xlu0 %96
    %v98 = vsel %vm94, %v97, %v81
    %s99 = scalar_lea.vmem [#allocation2], 2
    %v100 = vld [vmem:[%s99] ss:$0 sm:$0xff]
    %v101 = vxor.u32 %v100, 2147483648
    %v102 = vlaneseq
    %v103 = vand.u32 %v102, 127
    %vm104 = vcmp.eq.s32.totalorder %v103, 2
    %v105 = vmul.f32 %v101, %v98
    %106 = vadd.xlane.f32.xlu0 %v105
    %v107 = vpop.xlane.xlu0 %106
    %v108 = vsel %vm104, %v107, %v98
    %s109 = scalar_lea.vmem [#allocation2], 3
    %v110 = vld [vmem:[%s109] ss:$0 sm:$0xff]
    %v111 = vxor.u32 %v110, 2147483648
    %v112 = vlaneseq
    %v113 = vand.u32 %v112, 127
    %vm114 = vcmp.eq.s32.totalorder %v113, 3
    %v115 = vmul.f32 %v111, %v108
    %116 = vadd.xlane.f32.xlu0 %v115
    %v117 = vpop.xlane.xlu0 %116
    %v118 = vsel %vm114, %v117, %v108
    %s119 = scalar_lea.vmem [#allocation2], 4
    %v120 = vld [vmem:[%s119] ss:$0 sm:$0xff]
    %v121 = vxor.u32 %v120, 2147483648
    %v122 = vlaneseq
    %v123 = vand.u32 %v122, 127
    %vm124 = vcmp.eq.s32.totalorder %v123, 4
    %v125 = vmul.f32 %v121, %v118
    %126 = vadd.xlane.f32.xlu0 %v125
    %v127 = vpop.xlane.xlu0 %126
    %v128 = vsel %vm124, %v127, %v118
    %s129 = scalar_lea.vmem [#allocation2], 5
    %v130 = vld [vmem:[%s129] ss:$0 sm:$0xff]
    %v131 = vxor.u32 %v130, 2147483648
    %v132 = vlaneseq
    %v133 = vand.u32 %v132, 127
    %vm134 = vcmp.eq.s32.totalorder %v133, 5
    %v135 = vmul.f32 %v131, %v128
    %136 = vadd.xlane.f32.xlu0 %v135
    %v137 = vpop.xlane.xlu0 %136
    %v138 = vsel %vm134, %v137, %v128
    %s139 = scalar_lea.vmem [#allocation2], 6
    %v140 = vld [vmem:[%s139] ss:$0 sm:$0xff]
    %v141 = vxor.u32 %v140, 2147483648
    %v142 = vlaneseq
    %v143 = vand.u32 %v142, 127
    %vm144 = vcmp.eq.s32.totalorder %v143, 6
    %v145 = vmul.f32 %v141, %v138
    %146 = vadd.xlane.f32.xlu0 %v145
    %v147 = vpop.xlane.xlu0 %146
    %v148 = vsel %vm144, %v147, %v138
    %s149 = scalar_lea.vmem [#allocation2], 7
    %v150 = vld [vmem:[%s149] ss:$0 sm:$0xff]
    %v151 = vxor.u32 %v150, 2147483648
    %v152 = vlaneseq
    %v153 = vand.u32 %v152, 127
    %vm154 = vcmp.eq.s32.totalorder %v153, 7
    %v155 = vmul.f32 %v151, %v148
    %156 = vadd.xlane.f32.xlu0 %v155
    %v157 = vpop.xlane.xlu0 %156
    %v158 = vsel %vm154, %v157, %v148
    %s159 = scalar_lea.vmem [#allocation2], 8
    %v160 = vld [vmem:[%s159] ss:$0 sm:$0xff]
    %v161 = vxor.u32 %v160, 2147483648
    %v162 = vlaneseq
    %v163 = vand.u32 %v162, 127
    %vm164 = vcmp.eq.s32.totalorder %v163, 8
    %v165 = vmul.f32 %v161, %v158
    %166 = vadd.xlane.f32.xlu0 %v165
    %v167 = vpop.xlane.xlu0 %166
    %v168 = vsel %vm164, %v167, %v158
    %v169 = vmul.f32 %v161, %v88
    %170 = vadd.xlane.f32.xlu0 %v169
    %v171 = vpop.xlane.xlu0 %170
    %v172 = vsel %vm164, %v171, %v88
    %s173 = scalar_lea.vmem [#allocation2], 9
    %v174 = vld [vmem:[%s173] ss:$0 sm:$0xff]
    %v175 = vxor.u32 %v174, 2147483648
    %v176 = vlaneseq
    %v177 = vand.u32 %v176, 127
    %vm178 = vcmp.eq.s32.totalorder %v177, 9
    %v179 = vmul.f32 %v175, %v168
    %180 = vadd.xlane.f32.xlu0 %v179
    %v181 = vpop.xlane.xlu0 %180
    %v182 = vsel %vm178, %v181, %v168
    %v183 = vmul.f32 %v175, %v172
    %184 = vadd.xlane.f32.xlu0 %v183
    %v185 = vpop.xlane.xlu0 %184
    %v186 = vsel %vm178, %v185, %v172
    %s187 = scalar_lea.vmem [#allocation2], 10
    %v188 = vld [vmem:[%s187] ss:$0 sm:$0xff]
    %v189 = vxor.u32 %v188, 2147483648
    %v190 = vlaneseq
    %v191 = vand.u32 %v190, 127
    %vm192 = vcmp.eq.s32.totalorder %v191, 10
    %v193 = vmul.f32 %v189, %v182
    %194 = vadd.xlane.f32.xlu0 %v193
    %v195 = vpop.xlane.xlu0 %194
    %v196 = vsel %vm192, %v195, %v182
    %v197 = vmul.f32 %v189, %v186
    %198 = vadd.xlane.f32.xlu0 %v197
    %v199 = vpop.xlane.xlu0 %198
    %v200 = vsel %vm192, %v199, %v186
    %s201 = scalar_lea.vmem [#allocation2], 11
    %v202 = vld [vmem:[%s201] ss:$0 sm:$0xff]
    %v203 = vxor.u32 %v202, 2147483648
    %v204 = vlaneseq
    %v205 = vand.u32 %v204, 127
    %vm206 = vcmp.eq.s32.totalorder %v205, 11
    %v207 = vmul.f32 %v203, %v196
    %208 = vadd.xlane.f32.xlu0 %v207
    %v209 = vpop.xlane.xlu0 %208
    %v210 = vsel %vm206, %v209, %v196
    %v211 = vmul.f32 %v203, %v200
    %212 = vadd.xlane.f32.xlu0 %v211
    %v213 = vpop.xlane.xlu0 %212
    %v214 = vsel %vm206, %v213, %v200
    %v215 = vrcp.pop %v48
    %v216 = vmul.f32 %v210, %v215
    %vm217 = vweird.f32 %v48
    %v218 = vsel %vm217, %v210, %v216
    %219 = vst [vmem:[#allocation1] sm:$0xff] %v218
    %v220 = vrcp.pop %v64
    %v221 = vmul.f32 %v214, %v220
    %vm222 = vweird.f32 %v64
    %v223 = vsel %vm222, %v214, %v221
    %s224 = scalar_lea.vmem [#allocation1], 8
    %225 = vst [vmem:[%s224] sm:$0xff] %v223
    // Predicated region
    $region36: #{custom-call.13} parent=1 // pred_check
      _
    $region37: #{custom-call.13} parent=1 // pred_check_branch
      %227 = sbr.rel (0) target = $region39
    $region38: #{custom-call.13} parent=1 // pred_region
      // Predicated region
      $region40: #{custom-call.13} parent=38 // pred_check
        _
      $region41: #{custom-call.13} parent=38 // pred_check_branch
        %229 = sbr.rel (0) target = $region43
      $region42: #{custom-call.13} parent=38 // pred_region
        // Predicated region
        $region55: #{custom-call.13} parent=42 // pred_check
          _
        $region56: #{custom-call.13} parent=42 // pred_check_branch
          %246 = sbr.rel (0) target = $region58
        $region57: #{custom-call.13} parent=42 // pred_region
          loop: start=0, step=1, limit=1
          $region59: #{custom-call.13} parent=57 // loop_pre_header
            _
          $region60: #{custom-call.13} parent=57 // loop_header
            %s248 = sphi 0, %s252
            %p249 = scmp.ge.s32.totalorder %s248, 1
            %s253 = sphi [#allocation1], [#allocation1]
            %s254 = sphi %s1, %s1
          $region61: #{custom-call.13} parent=57 // loop_header_branch
            %251 = sbr.rel (%p249) target = $region65
          $region62: #{custom-call.13} parent=57 // loop_body
            %v255 = vld [vmem:[%s253] sm:$0xff]
            %256 = vst [vmem:[%s254] sm:$0xff] %v255
            %v257 = vld [vmem:[%s253 + $0x8] sm:$0xff]
            %258 = vst [vmem:[%s254 + $0x8] sm:$0xff] %v257
          $region63: #{custom-call.13} parent=57 // loop_footer
            %s252 = sadd.s32 1, %s248
          $region64: #{custom-call.13} parent=57 // loop_footer_branch
            %247 = sbr.rel target = $region60
          $region65: #{custom-call.13} parent=57 // loop_exit
            _
        $region58: #{custom-call.13} parent=42 // pred_fallthru
          _
        // Predicated region
        $region66: #{custom-call.13} parent=42 // pred_check
          _
        $region67: #{custom-call.13} parent=42 // pred_check_branch
          %260 = sbr.rel target = $region69
        $region68: #{custom-call.13} parent=42 // pred_region
          _
        $region69: #{custom-call.13} parent=42 // pred_fallthru
          _
      $region43: #{custom-call.13} parent=38 // pred_fallthru
        _
      // Predicated region
      $region44: #{custom-call.13} parent=38 // pred_check
        _
      $region45: #{custom-call.13} parent=38 // pred_check_branch
        %231 = sbr.rel target = $region47
      $region46: #{custom-call.13} parent=38 // pred_region
        loop: start=0, step=1, limit=1
        $region48: #{custom-call.13} parent=46 // loop_pre_header
          _
        $region49: #{custom-call.13} parent=46 // loop_header
          %s234 = sphi 0, %s238
          %p235 = scmp.ge.s32.totalorder %s234, 1
          %s239 = sphi [#allocation1], [#allocation1]
          %s240 = sphi %s1, %s1
        $region50: #{custom-call.13} parent=46 // loop_header_branch
          %237 = sbr.rel (%p235) target = $region54
        $region51: #{custom-call.13} parent=46 // loop_body
          %v241 = vld [vmem:[%s239] sm:$0xff]
          %242 = vst [vmem:[%s240] sm:$0xff] %v241
          %v243 = vld [vmem:[%s239 + $0x8] sm:$0xff]
          %244 = vst [vmem:[%s240 + $0x8] sm:$0xff] %v243
        $region52: #{custom-call.13} parent=46 // loop_footer
          %s238 = sadd.s32 1, %s234
        $region53: #{custom-call.13} parent=46 // loop_footer_branch
          %233 = sbr.rel target = $region49
        $region54: #{custom-call.13} parent=46 // loop_exit
          _
      $region47: #{custom-call.13} parent=38 // pred_fallthru
        _
    $region39: #{custom-call.13} parent=1 // pred_fallthru
      _
    %261 = vnop

// kernel: two_stage_weak_inlier_count.1
$region0: #{two_stage_weak_inlier_count.1}
  #allocation0 [shape = 'u32[]', space=smem, size = 0x4, offset = 0x4, fixed_abs, tag = 'smem constant byte address 0x4 - core index']
  #allocation1 [shape = 'u32[144,128]{1,0:T(1,128)}', space=vmem, size = 0x12000, scoped, tag = 'internal scratch']
  %s0 = inlined_call_operand.vmem [shape: f32[2,2,225], index: 0, kind: input, shape index: {}]
  %s1 = inlined_call_operand.vmem [shape: f32[2,225,225], index: 1, kind: input, shape index: {}]
  %s2 = inlined_call_operand.vmem [shape: f32[2,8,128], index: 2, kind: output, shape index: {}]
  %s3 = sld [smem:[#allocation0]]
  $region41: #{two_stage_weak_inlier_count.1} parent=0
    _
  %s5 = ssub.s32 1, %s3
  %s6 = scalar_select 0, %s5, %s3
  loop: start=0, step=1, limit=4
  $region2: #{two_stage_weak_inlier_count.1} parent=0 // loop_pre_header
    _
  $region3: #{two_stage_weak_inlier_count.1} parent=0 // loop_header
    %s8 = sphi 0, %s12
    %p9 = scmp.ge.s32.totalorder %s8, 4
    %s18 = sphi 0, %s20
    %s21 = sphi 0, %s18
    %s22 = sphi 0, %s21
    %s38 = sphi 0, %s22
    %s44 = sphi 0, %s46
    %s47 = sphi 0, %s44
    %s48 = sphi 0, %s47
    %s64 = sphi 0, %s48
    %s70 = sphi 0, %s72
    %s73 = sphi 0, %s70
    %s74 = sphi 0, %s73
    %s90 = sphi 0, %s74
  $region4: #{two_stage_weak_inlier_count.1} parent=0 // loop_header_branch
    %11 = sbr.rel (%p9) target = $region8
  $region5: #{two_stage_weak_inlier_count.1} parent=0 // loop_body
    %s13 = ssub.s32 %s8, 1
    %s14 = ssub.s32 %s8, 2
    %s15 = sadd.s32 %s8, 1
    %s16 = ssub.s32 %s8, %s15
    %p17 = scmp.eq.s32.totalorder %s16, 0
    %s19 = sadd.s32 %s18, 1
    %s20 = scalar_select %p17, %s18, %s19
    %p23 = pneg %p17
    %p24 = scmp.eq.s32.totalorder %s8, 1
    %p25 = por %p23, %p24
    %p26 = scmp.ne.s32.totalorder %s18, %s21
    %p27 = scmp.eq.s32.totalorder %s8, 0
    %p28 = por %p26, %p27
    %p29 = scmp.ne.s32.totalorder %s18, %s21
    %p30 = scmp.eq.s32.totalorder %s13, 1
    %p31 = por %p29, %p30
    %p32 = scmp.ne.s32.totalorder %s21, %s22
    %p33 = scmp.eq.s32.totalorder %s13, 0
    %p34 = por %p32, %p33
    %p35 = scmp.ne.s32.totalorder %s21, %s22
    %p36 = scmp.eq.s32.totalorder %s14, 1
    %p37 = por %p35, %p36
    %p39 = scmp.ne.s32.totalorder %s22, %s38
    %p40 = scmp.eq.s32.totalorder %s14, 0
    %p41 = por %p39, %p40
    %s42 = ssub.s32 %s8, %s15
    %p43 = scmp.eq.s32.totalorder %s42, 0
    %s45 = sadd.s32 %s44, 1
    %s46 = scalar_select %p43, %s44, %s45
    %p49 = pneg %p43
    %p50 = scmp.eq.s32.totalorder %s8, 1
    %p51 = por %p49, %p50
    %p52 = scmp.ne.s32.totalorder %s44, %s47
    %p53 = scmp.eq.s32.totalorder %s8, 0
    %p54 = por %p52, %p53
    %p55 = scmp.ne.s32.totalorder %s44, %s47
    %p56 = scmp.eq.s32.totalorder %s13, 1
    %p57 = por %p55, %p56
    %p58 = scmp.ne.s32.totalorder %s47, %s48
    %p59 = scmp.eq.s32.totalorder %s13, 0
    %p60 = por %p58, %p59
    %p61 = scmp.ne.s32.totalorder %s47, %s48
    %p62 = scmp.eq.s32.totalorder %s14, 1
    %p63 = por %p61, %p62
    %p65 = scmp.ne.s32.totalorder %s48, %s64
    %p66 = scmp.eq.s32.totalorder %s14, 0
    %p67 = por %p65, %p66
    %s68 = ssub.s32 %s8, %s15
    %p69 = scmp.eq.s32.totalorder %s68, 0
    %s71 = sadd.s32 %s70, 1
    %s72 = scalar_select %p69, %s70, %s71
    %p75 = pneg %p69
    %p76 = scmp.eq.s32.totalorder %s8, 1
    %p77 = por %p75, %p76
    %p78 = scmp.ne.s32.totalorder %s70, %s73
    %p79 = scmp.eq.s32.totalorder %s8, 0
    %p80 = por %p78, %p79
    %p81 = scmp.ne.s32.totalorder %s70, %s73
    %p82 = scmp.eq.s32.totalorder %s13, 1
    %p83 = por %p81, %p82
    %p84 = scmp.ne.s32.totalorder %s73, %s74
    %p85 = scmp.eq.s32.totalorder %s13, 0
    %p86 = por %p84, %p85
    %p87 = scmp.ne.s32.totalorder %s73, %s74
    %p88 = scmp.eq.s32.totalorder %s14, 1
    %p89 = por %p87, %p88
    %p91 = scmp.ne.s32.totalorder %s74, %s90
    %p92 = scmp.eq.s32.totalorder %s14, 0
    %p93 = por %p91, %p92
    %p94 = scmp.le.s32.totalorder 1, %s8
    %p95 = scmp.lt.s32.totalorder %s8, 3
    %p96 = pnand %p94, %p95
    %p97 = pneg %p96
    // Predicated region
    $region9: #{two_stage_weak_inlier_count.1} parent=5 // pred_check
      _
    $region10: #{two_stage_weak_inlier_count.1} parent=5 // pred_check_branch
      %99 = sbr.rel (%p96) target = $region12
    $region11: #{two_stage_weak_inlier_count.1} parent=5 // pred_region
      %s100 = ssub.s32 %s8, 1
    $region12: #{two_stage_weak_inlier_count.1} parent=5 // pred_fallthru
      _
    %p101 = scmp.lt.s32.totalorder %s8, 2
    // Predicated region
    $region13: #{two_stage_weak_inlier_count.1} parent=5 // pred_check
      %p102 = pneg %p101
    $region14: #{two_stage_weak_inlier_count.1} parent=5 // pred_check_branch
      %104 = sbr.rel (%p102) target = $region16
    $region15: #{two_stage_weak_inlier_count.1} parent=5 // pred_region
      // Predicated region
      $region17: #{two_stage_weak_inlier_count.1} parent=15 // pred_check
        %p105 = pneg %p28
      $region18: #{two_stage_weak_inlier_count.1} parent=15 // pred_check_branch
        %107 = sbr.rel (%p105) target = $region20
      $region19: #{two_stage_weak_inlier_count.1} parent=15 // pred_region
        %p108 = scmp.lt.s32.totalorder %s8, 1
        %s109 = scalar_select %p108, %s8, 1
        %s110 = smul.addr %s109, 2
        %s111 = smul.addr %s110, 2
        %s112 = scalar_lea.vmem %s0, %s111
      $region20: #{two_stage_weak_inlier_count.1} parent=15 // pred_fallthru
        _
      // Predicated region
      $region21: #{two_stage_weak_inlier_count.1} parent=15 // pred_check
        %p113 = pneg %p54
      $region22: #{two_stage_weak_inlier_count.1} parent=15 // pred_check_branch
        %115 = sbr.rel (%p113) target = $region24
      $region23: #{two_stage_weak_inlier_count.1} parent=15 // pred_region
        %p116 = scmp.lt.s32.totalorder %s8, 1
        %s117 = scalar_select %p116, %s8, 1
        %s118 = smul.addr %s117, 58
        %s119 = smul.addr %s118, 8
        %s120 = scalar_lea.vmem %s1, %s119
      $region24: #{two_stage_weak_inlier_count.1} parent=15 // pred_fallthru
        _
    $region16: #{two_stage_weak_inlier_count.1} parent=5 // pred_fallthru
      _
    %p121 = scmp.le.s32.totalorder 1, %s8
    %p122 = scmp.lt.s32.totalorder %s8, 3
    %p123 = pnand %p121, %p122
    %p124 = pneg %p123
    // Predicated region
    $region25: #{two_stage_weak_inlier_count.1} parent=5 // pred_check
      _
    $region26: #{two_stage_weak_inlier_count.1} parent=5 // pred_check_branch
      %126 = sbr.rel (%p123) target = $region28
    $region27: #{two_stage_weak_inlier_count.1} parent=5 // pred_region
      %s127 = ssub.s32 %s8, 1
      %p128 = scmp.lt.s32.totalorder %s13, 1
      %s129 = scalar_select %p128, %s13, 1
      %s130 = smul.addr %s129, 2
      %s131 = smul.addr %s130, 2
      %s132 = scalar_lea.vmem %s0, %s131
      %p133 = pneg %p34
      %p134 = pneg %p31
      %p135 = scmp.lt.s32.totalorder %s13, 1
      %s136 = scalar_select %p135, %s13, 1
      %s137 = smul.addr %s136, 58
      %s138 = smul.addr %s137, 8
      %s139 = scalar_lea.vmem %s1, %s138
      %p140 = pneg %p60
      %p141 = pneg %p57
      %p142 = pneg %p86
      %p143 = pneg %p83
      %p144 = scmp.lt.s32.totalorder %s13, 1
      %s145 = scalar_select %p144, %s13, 1
      %s146 = smul.addr %s145, 8
      %s147 = scalar_lea.vmem %s2, %s146
      %p148 = scmp.lt.s32.totalorder %s13, 1
      %s149 = scalar_select %p148, %s13, 1
      %s150 = smul.addr %s149, 2
      %s151 = smul.addr %s150, 2
      %s152 = scalar_lea.vmem %s0, %s151
      %p153 = scmp.lt.s32.totalorder %s13, 1
      %s154 = scalar_select %p153, %s13, 1
      %s155 = smul.addr %s154, 58
      %s156 = smul.addr %s155, 8
      %s157 = scalar_lea.vmem %s1, %s156
      %p158 = scmp.lt.s32.totalorder %s13, 1
      %s159 = scalar_select %p158, %s13, 1
      %s160 = smul.addr %s159, 8
      %s161 = scalar_lea.vmem %s2, %s160
      %v162 = vlaneseq
      %v163 = vshrl.u32 %v162, 7
      %v164 = vadd.s32 %v163, 8
      %v165 = vadd.s32 %v163, 16
      %v166 = vadd.s32 %v163, 24
      %v167 = vadd.s32 %v163, 32
      %v168 = vadd.s32 %v163, 40
      %v169 = vadd.s32 %v163, 48
      %v170 = vadd.s32 %v163, 56
      %v171 = vadd.s32 %v163, 64
      %v172 = vadd.s32 %v163, 72
      %v173 = vadd.s32 %v163, 80
      %v174 = vadd.s32 %v163, 88
      %v175 = vadd.s32 %v163, 96
      %v176 = vadd.s32 %v163, 104
      %v177 = vadd.s32 %v163, 112
      %v178 = vadd.s32 %v163, 120
      %v179 = vadd.s32 %v163, 128
      %v180 = vadd.s32 %v163, 136
      %v181 = vadd.s32 %v163, 144
      %v182 = vadd.s32 %v163, 152
      %v183 = vadd.s32 %v163, 160
      %v184 = vadd.s32 %v163, 168
      %v185 = vadd.s32 %v163, 176
      %v186 = vadd.s32 %v163, 184
      %v187 = vadd.s32 %v163, 192
      %v188 = vadd.s32 %v163, 200
      %v189 = vadd.s32 %v163, 208
      %v190 = vadd.s32 %v163, 216
      %v191 = vadd.s32 %v163, 224
      %v192 = vcvt.s32.f32 %v163
      %v193 = vcvt.s32.f32 %v164
      %v194 = vcvt.s32.f32 %v165
      %v195 = vcvt.s32.f32 %v166
      %v196 = vcvt.s32.f32 %v167
      %v197 = vcvt.s32.f32 %v168
      %v198 = vcvt.s32.f32 %v169
      %v199 = vcvt.s32.f32 %v170
      %v200 = vcvt.s32.f32 %v171
      %v201 = vcvt.s32.f32 %v172
      %v202 = vcvt.s32.f32 %v173
      %v203 = vcvt.s32.f32 %v174
      %v204 = vcvt.s32.f32 %v175
      %v205 = vcvt.s32.f32 %v176
      %v206 = vcvt.s32.f32 %v177
      %v207 = vcvt.s32.f32 %v178
      %v208 = vcvt.s32.f32 %v179
      %v209 = vcvt.s32.f32 %v180
      %v210 = vcvt.s32.f32 %v181
      %v211 = vcvt.s32.f32 %v182
      %v212 = vcvt.s32.f32 %v183
      %v213 = vcvt.s32.f32 %v184
      %v214 = vcvt.s32.f32 %v185
      %v215 = vcvt.s32.f32 %v186
      %v216 = vcvt.s32.f32 %v187
      %v217 = vcvt.s32.f32 %v188
      %v218 = vcvt.s32.f32 %v189
      %v219 = vcvt.s32.f32 %v190
      %v220 = vcvt.s32.f32 %v191
      %v221 = vadd.f32 %v192, 0.5
      %v222 = vadd.f32 %v193, 0.5
      %v223 = vadd.f32 %v194, 0.5
      %v224 = vadd.f32 %v195, 0.5
      %v225 = vadd.f32 %v196, 0.5
      %v226 = vadd.f32 %v197, 0.5
      %v227 = vadd.f32 %v198, 0.5
      %v228 = vadd.f32 %v199, 0.5
      %v229 = vadd.f32 %v200, 0.5
      %v230 = vadd.f32 %v201, 0.5
      %v231 = vadd.f32 %v202, 0.5
      %v232 = vadd.f32 %v203, 0.5
      %v233 = vadd.f32 %v204, 0.5
      %v234 = vadd.f32 %v205, 0.5
      %v235 = vadd.f32 %v206, 0.5
      %v236 = vadd.f32 %v207, 0.5
      %v237 = vadd.f32 %v208, 0.5
      %v238 = vadd.f32 %v209, 0.5
      %v239 = vadd.f32 %v210, 0.5
      %v240 = vadd.f32 %v211, 0.5
      %v241 = vadd.f32 %v212, 0.5
      %v242 = vadd.f32 %v213, 0.5
      %v243 = vadd.f32 %v214, 0.5
      %v244 = vadd.f32 %v215, 0.5
      %v245 = vadd.f32 %v216, 0.5
      %v246 = vadd.f32 %v217, 0.5
      %v247 = vadd.f32 %v218, 0.5
      %v248 = vadd.f32 %v219, 0.5
      %v249 = vadd.f32 %v220, 0.5
      %v250 = vmul.f32 %v221, 0.06666667
      %v251 = vmul.f32 %v222, 0.06666667
      %v252 = vmul.f32 %v223, 0.06666667
      %v253 = vmul.f32 %v224, 0.06666667
      %v254 = vmul.f32 %v225, 0.06666667
      %v255 = vmul.f32 %v226, 0.06666667
      %v256 = vmul.f32 %v227, 0.06666667
      %v257 = vmul.f32 %v228, 0.06666667
      %v258 = vmul.f32 %v229, 0.06666667
      %v259 = vmul.f32 %v230, 0.06666667
      %v260 = vmul.f32 %v231, 0.06666667
      %v261 = vmul.f32 %v232, 0.06666667
      %v262 = vmul.f32 %v233, 0.06666667
      %v263 = vmul.f32 %v234, 0.06666667
      %v264 = vmul.f32 %v235, 0.06666667
      %v265 = vmul.f32 %v236, 0.06666667
      %v266 = vmul.f32 %v237, 0.06666667
      %v267 = vmul.f32 %v238, 0.06666667
      %v268 = vmul.f32 %v239, 0.06666667
      %v269 = vmul.f32 %v240, 0.06666667
      %v270 = vmul.f32 %v241, 0.06666667
      %v271 = vmul.f32 %v242, 0.06666667
      %v272 = vmul.f32 %v243, 0.06666667
      %v273 = vmul.f32 %v244, 0.06666667
      %v274 = vmul.f32 %v245, 0.06666667
      %v275 = vmul.f32 %v246, 0.06666667
      %v276 = vmul.f32 %v247, 0.06666667
      %v277 = vmul.f32 %v248, 0.06666667
      %v278 = vmul.f32 %v249, 0.06666667
      %v279 = vfloor.f32 %v250
      %v280 = vfloor.f32 %v251
      %v281 = vfloor.f32 %v252
      %v282 = vfloor.f32 %v253
      %v283 = vfloor.f32 %v254
      %v284 = vfloor.f32 %v255
      %v285 = vfloor.f32 %v256
      %v286 = vfloor.f32 %v257
      %v287 = vfloor.f32 %v258
      %v288 = vfloor.f32 %v259
      %v289 = vfloor.f32 %v260
      %v290 = vfloor.f32 %v261
      %v291 = vfloor.f32 %v262
      %v292 = vfloor.f32 %v263
      %v293 = vfloor.f32 %v264
      %v294 = vfloor.f32 %v265
      %v295 = vfloor.f32 %v266
      %v296 = vfloor.f32 %v267
      %v297 = vfloor.f32 %v268
      %v298 = vfloor.f32 %v269
      %v299 = vfloor.f32 %v270
      %v300 = vfloor.f32 %v271
      %v301 = vfloor.f32 %v272
      %v302 = vfloor.f32 %v273
      %v303 = vfloor.f32 %v274
      %v304 = vfloor.f32 %v275
      %v305 = vfloor.f32 %v276
      %v306 = vfloor.f32 %v277
      %v307 = vfloor.f32 %v278
      %v308 = vmul.f32 %v279, 15.0
      %v309 = vmul.f32 %v280, 15.0
      %v310 = vmul.f32 %v281, 15.0
      %v311 = vmul.f32 %v282, 15.0
      %v312 = vmul.f32 %v283, 15.0
      %v313 = vmul.f32 %v284, 15.0
      %v314 = vmul.f32 %v285, 15.0
      %v315 = vmul.f32 %v286, 15.0
      %v316 = vmul.f32 %v287, 15.0
      %v317 = vmul.f32 %v288, 15.0
      %v318 = vmul.f32 %v289, 15.0
      %v319 = vmul.f32 %v290, 15.0
      %v320 = vmul.f32 %v291, 15.0
      %v321 = vmul.f32 %v292, 15.0
      %v322 = vmul.f32 %v293, 15.0
      %v323 = vmul.f32 %v294, 15.0
      %v324 = vmul.f32 %v295, 15.0
      %v325 = vmul.f32 %v296, 15.0
      %v326 = vmul.f32 %v297, 15.0
      %v327 = vmul.f32 %v298, 15.0
      %v328 = vmul.f32 %v299, 15.0
      %v329 = vmul.f32 %v300, 15.0
      %v330 = vmul.f32 %v301, 15.0
      %v331 = vmul.f32 %v302, 15.0
      %v332 = vmul.f32 %v303, 15.0
      %v333 = vmul.f32 %v304, 15.0
      %v334 = vmul.f32 %v305, 15.0
      %v335 = vmul.f32 %v306, 15.0
      %v336 = vmul.f32 %v307, 15.0
      %v337 = vsub.f32 %v192, %v308
      %v338 = vsub.f32 %v193, %v309
      %v339 = vsub.f32 %v194, %v310
      %v340 = vsub.f32 %v195, %v311
      %v341 = vsub.f32 %v196, %v312
      %v342 = vsub.f32 %v197, %v313
      %v343 = vsub.f32 %v198, %v314
      %v344 = vsub.f32 %v199, %v315
      %v345 = vsub.f32 %v200, %v316
      %v346 = vsub.f32 %v201, %v317
      %v347 = vsub.f32 %v202, %v318
      %v348 = vsub.f32 %v203, %v319
      %v349 = vsub.f32 %v204, %v320
      %v350 = vsub.f32 %v205, %v321
      %v351 = vsub.f32 %v206, %v322
      %v352 = vsub.f32 %v207, %v323
      %v353 = vsub.f32 %v208, %v324
      %v354 = vsub.f32 %v209, %v325
      %v355 = vsub.f32 %v210, %v326
      %v356 = vsub.f32 %v211, %v327
      %v357 = vsub.f32 %v212, %v328
      %v358 = vsub.f32 %v213, %v329
      %v359 = vsub.f32 %v214, %v330
      %v360 = vsub.f32 %v215, %v331
      %v361 = vsub.f32 %v216, %v332
      %v362 = vsub.f32 %v217, %v333
      %v363 = vsub.f32 %v218, %v334
      %v364 = vsub.f32 %v219, %v335
      %v365 = vsub.f32 %v220, %v336
      %v366 = vsub.f32 %v337, 1.0
      %v367 = vsub.f32 %v338, 1.0
      %v368 = vsub.f32 %v339, 1.0
      %v369 = vsub.f32 %v340, 1.0
      %v370 = vsub.f32 %v341, 1.0
      %v371 = vsub.f32 %v342, 1.0
      %v372 = vsub.f32 %v343, 1.0
      %v373 = vsub.f32 %v344, 1.0
      %v374 = vsub.f32 %v345, 1.0
      %v375 = vsub.f32 %v346, 1.0
      %v376 = vsub.f32 %v347, 1.0
      %v377 = vsub.f32 %v348, 1.0
      %v378 = vsub.f32 %v349, 1.0
      %v379 = vsub.f32 %v350, 1.0
      %v380 = vsub.f32 %v351, 1.0
      %v381 = vsub.f32 %v352, 1.0
      %v382 = vsub.f32 %v353, 1.0
      %v383 = vsub.f32 %v354, 1.0
      %v384 = vsub.f32 %v355, 1.0
      %v385 = vsub.f32 %v356, 1.0
      %v386 = vsub.f32 %v357, 1.0
      %v387 = vsub.f32 %v358, 1.0
      %v388 = vsub.f32 %v359, 1.0
      %v389 = vsub.f32 %v360, 1.0
      %v390 = vsub.f32 %v361, 1.0
      %v391 = vsub.f32 %v362, 1.0
      %v392 = vsub.f32 %v363, 1.0
      %v393 = vsub.f32 %v364, 1.0
      %v394 = vsub.f32 %v365, 1.0
      %v395 = vmax.f32 %v366, 0.0
      %v396 = vmax.f32 %v367, 0.0
      %v397 = vmax.f32 %v368, 0.0
      %v398 = vmax.f32 %v369, 0.0
      %v399 = vmax.f32 %v370, 0.0
      %v400 = vmax.f32 %v371, 0.0
      %v401 = vmax.f32 %v372, 0.0
      %v402 = vmax.f32 %v373, 0.0
      %v403 = vmax.f32 %v374, 0.0
      %v404 = vmax.f32 %v375, 0.0
      %v405 = vmax.f32 %v376, 0.0
      %v406 = vmax.f32 %v377, 0.0
      %v407 = vmax.f32 %v378, 0.0
      %v408 = vmax.f32 %v379, 0.0
      %v409 = vmax.f32 %v380, 0.0
      %v410 = vmax.f32 %v381, 0.0
      %v411 = vmax.f32 %v382, 0.0
      %v412 = vmax.f32 %v383, 0.0
      %v413 = vmax.f32 %v384, 0.0
      %v414 = vmax.f32 %v385, 0.0
      %v415 = vmax.f32 %v386, 0.0
      %v416 = vmax.f32 %v387, 0.0
      %v417 = vmax.f32 %v388, 0.0
      %v418 = vmax.f32 %v389, 0.0
      %v419 = vmax.f32 %v390, 0.0
      %v420 = vmax.f32 %v391, 0.0
      %v421 = vmax.f32 %v392, 0.0
      %v422 = vmax.f32 %v393, 0.0
      %v423 = vmax.f32 %v394, 0.0
      %v424 = vsub.f32 %v395, 1.0
      %v425 = vsub.f32 %v396, 1.0
      %v426 = vsub.f32 %v397, 1.0
      %v427 = vsub.f32 %v398, 1.0
      %v428 = vsub.f32 %v399, 1.0
      %v429 = vsub.f32 %v400, 1.0
      %v430 = vsub.f32 %v401, 1.0
      %v431 = vsub.f32 %v402, 1.0
      %v432 = vsub.f32 %v403, 1.0
      %v433 = vsub.f32 %v404, 1.0
      %v434 = vsub.f32 %v405, 1.0
      %v435 = vsub.f32 %v406, 1.0
      %v436 = vsub.f32 %v407, 1.0
      %v437 = vsub.f32 %v408, 1.0
      %v438 = vsub.f32 %v409, 1.0
      %v439 = vsub.f32 %v410, 1.0
      %v440 = vsub.f32 %v411, 1.0
      %v441 = vsub.f32 %v412, 1.0
      %v442 = vsub.f32 %v413, 1.0
      %v443 = vsub.f32 %v414, 1.0
      %v444 = vsub.f32 %v415, 1.0
      %v445 = vsub.f32 %v416, 1.0
      %v446 = vsub.f32 %v417, 1.0
      %v447 = vsub.f32 %v418, 1.0
      %v448 = vsub.f32 %v419, 1.0
      %v449 = vsub.f32 %v420, 1.0
      %v450 = vsub.f32 %v421, 1.0
      %v451 = vsub.f32 %v422, 1.0
      %v452 = vsub.f32 %v423, 1.0
      %v453 = vadd.f32 %v337, 1.0
      %v454 = vadd.f32 %v338, 1.0
      %v455 = vadd.f32 %v339, 1.0
      %v456 = vadd.f32 %v340, 1.0
      %v457 = vadd.f32 %v341, 1.0
      %v458 = vadd.f32 %v342, 1.0
      %v459 = vadd.f32 %v343, 1.0
      %v460 = vadd.f32 %v344, 1.0
      %v461 = vadd.f32 %v345, 1.0
      %v462 = vadd.f32 %v346, 1.0
      %v463 = vadd.f32 %v347, 1.0
      %v464 = vadd.f32 %v348, 1.0
      %v465 = vadd.f32 %v349, 1.0
      %v466 = vadd.f32 %v350, 1.0
      %v467 = vadd.f32 %v351, 1.0
      %v468 = vadd.f32 %v352, 1.0
      %v469 = vadd.f32 %v353, 1.0
      %v470 = vadd.f32 %v354, 1.0
      %v471 = vadd.f32 %v355, 1.0
      %v472 = vadd.f32 %v356, 1.0
      %v473 = vadd.f32 %v357, 1.0
      %v474 = vadd.f32 %v358, 1.0
      %v475 = vadd.f32 %v359, 1.0
      %v476 = vadd.f32 %v360, 1.0
      %v477 = vadd.f32 %v361, 1.0
      %v478 = vadd.f32 %v362, 1.0
      %v479 = vadd.f32 %v363, 1.0
      %v480 = vadd.f32 %v364, 1.0
      %v481 = vadd.f32 %v365, 1.0
      %v482 = vmin.f32 %v453, 14.0
      %v483 = vmin.f32 %v454, 14.0
      %v484 = vmin.f32 %v455, 14.0
      %v485 = vmin.f32 %v456, 14.0
      %v486 = vmin.f32 %v457, 14.0
      %v487 = vmin.f32 %v458, 14.0
      %v488 = vmin.f32 %v459, 14.0
      %v489 = vmin.f32 %v460, 14.0
      %v490 = vmin.f32 %v461, 14.0
      %v491 = vmin.f32 %v462, 14.0
      %v492 = vmin.f32 %v463, 14.0
      %v493 = vmin.f32 %v464, 14.0
      %v494 = vmin.f32 %v465, 14.0
      %v495 = vmin.f32 %v466, 14.0
      %v496 = vmin.f32 %v467, 14.0
      %v497 = vmin.f32 %v468, 14.0
      %v498 = vmin.f32 %v469, 14.0
      %v499 = vmin.f32 %v470, 14.0
      %v500 = vmin.f32 %v471, 14.0
      %v501 = vmin.f32 %v472, 14.0
      %v502 = vmin.f32 %v473, 14.0
      %v503 = vmin.f32 %v474, 14.0
      %v504 = vmin.f32 %v475, 14.0
      %v505 = vmin.f32 %v476, 14.0
      %v506 = vmin.f32 %v477, 14.0
      %v507 = vmin.f32 %v478, 14.0
      %v508 = vmin.f32 %v479, 14.0
      %v509 = vmin.f32 %v480, 14.0
      %v510 = vmin.f32 %v481, 14.0
      %v511 = vadd.f32 %v482, 1.0
      %v512 = vadd.f32 %v483, 1.0
      %v513 = vadd.f32 %v484, 1.0
      %v514 = vadd.f32 %v485, 1.0
      %v515 = vadd.f32 %v486, 1.0
      %v516 = vadd.f32 %v487, 1.0
      %v517 = vadd.f32 %v488, 1.0
      %v518 = vadd.f32 %v489, 1.0
      %v519 = vadd.f32 %v490, 1.0
      %v520 = vadd.f32 %v491, 1.0
      %v521 = vadd.f32 %v492, 1.0
      %v522 = vadd.f32 %v493, 1.0
      %v523 = vadd.f32 %v494, 1.0
      %v524 = vadd.f32 %v495, 1.0
      %v525 = vadd.f32 %v496, 1.0
      %v526 = vadd.f32 %v497, 1.0
      %v527 = vadd.f32 %v498, 1.0
      %v528 = vadd.f32 %v499, 1.0
      %v529 = vadd.f32 %v500, 1.0
      %v530 = vadd.f32 %v501, 1.0
      %v531 = vadd.f32 %v502, 1.0
      %v532 = vadd.f32 %v503, 1.0
      %v533 = vadd.f32 %v504, 1.0
      %v534 = vadd.f32 %v505, 1.0
      %v535 = vadd.f32 %v506, 1.0
      %v536 = vadd.f32 %v507, 1.0
      %v537 = vadd.f32 %v508, 1.0
      %v538 = vadd.f32 %v509, 1.0
      %v539 = vadd.f32 %v510, 1.0
      %v540 = vsub.f32 %v279, 1.0
      %v541 = vsub.f32 %v280, 1.0
      %v542 = vsub.f32 %v281, 1.0
      %v543 = vsub.f32 %v282, 1.0
      %v544 = vsub.f32 %v283, 1.0
      %v545 = vsub.f32 %v284, 1.0
      %v546 = vsub.f32 %v285, 1.0
      %v547 = vsub.f32 %v286, 1.0
      %v548 = vsub.f32 %v287, 1.0
      %v549 = vsub.f32 %v288, 1.0
      %v550 = vsub.f32 %v289, 1.0
      %v551 = vsub.f32 %v290, 1.0
      %v552 = vsub.f32 %v291, 1.0
      %v553 = vsub.f32 %v292, 1.0
      %v554 = vsub.f32 %v293, 1.0
      %v555 = vsub.f32 %v294, 1.0
      %v556 = vsub.f32 %v295, 1.0
      %v557 = vsub.f32 %v296, 1.0
      %v558 = vsub.f32 %v297, 1.0
      %v559 = vsub.f32 %v298, 1.0
      %v560 = vsub.f32 %v299, 1.0
      %v561 = vsub.f32 %v300, 1.0
      %v562 = vsub.f32 %v301, 1.0
      %v563 = vsub.f32 %v302, 1.0
      %v564 = vsub.f32 %v303, 1.0
      %v565 = vsub.f32 %v304, 1.0
      %v566 = vsub.f32 %v305, 1.0
      %v567 = vsub.f32 %v306, 1.0
      %v568 = vsub.f32 %v307, 1.0
      %v569 = vmax.f32 %v540, 0.0
      %v570 = vmax.f32 %v541, 0.0
      %v571 = vmax.f32 %v542, 0.0
      %v572 = vmax.f32 %v543, 0.0
      %v573 = vmax.f32 %v544, 0.0
      %v574 = vmax.f32 %v545, 0.0
      %v575 = vmax.f32 %v546, 0.0
      %v576 = vmax.f32 %v547, 0.0
      %v577 = vmax.f32 %v548, 0.0
      %v578 = vmax.f32 %v549, 0.0
      %v579 = vmax.f32 %v550, 0.0
      %v580 = vmax.f32 %v551, 0.0
      %v581 = vmax.f32 %v552, 0.0
      %v582 = vmax.f32 %v553, 0.0
      %v583 = vmax.f32 %v554, 0.0
      %v584 = vmax.f32 %v555, 0.0
      %v585 = vmax.f32 %v556, 0.0
      %v586 = vmax.f32 %v557, 0.0
      %v587 = vmax.f32 %v558, 0.0
      %v588 = vmax.f32 %v559, 0.0
      %v589 = vmax.f32 %v560, 0.0
      %v590 = vmax.f32 %v561, 0.0
      %v591 = vmax.f32 %v562, 0.0
      %v592 = vmax.f32 %v563, 0.0
      %v593 = vmax.f32 %v564, 0.0
      %v594 = vmax.f32 %v565, 0.0
      %v595 = vmax.f32 %v566, 0.0
      %v596 = vmax.f32 %v567, 0.0
      %v597 = vmax.f32 %v568, 0.0
      %v598 = vsub.f32 %v569, 1.0
      %v599 = vsub.f32 %v570, 1.0
      %v600 = vsub.f32 %v571, 1.0
      %v601 = vsub.f32 %v572, 1.0
      %v602 = vsub.f32 %v573, 1.0
      %v603 = vsub.f32 %v574, 1.0
      %v604 = vsub.f32 %v575, 1.0
      %v605 = vsub.f32 %v576, 1.0
      %v606 = vsub.f32 %v577, 1.0
      %v607 = vsub.f32 %v578, 1.0
      %v608 = vsub.f32 %v579, 1.0
      %v609 = vsub.f32 %v580, 1.0
      %v610 = vsub.f32 %v581, 1.0
      %v611 = vsub.f32 %v582, 1.0
      %v612 = vsub.f32 %v583, 1.0
      %v613 = vsub.f32 %v584, 1.0
      %v614 = vsub.f32 %v585, 1.0
      %v615 = vsub.f32 %v586, 1.0
      %v616 = vsub.f32 %v587, 1.0
      %v617 = vsub.f32 %v588, 1.0
      %v618 = vsub.f32 %v589, 1.0
      %v619 = vsub.f32 %v590, 1.0
      %v620 = vsub.f32 %v591, 1.0
      %v621 = vsub.f32 %v592, 1.0
      %v622 = vsub.f32 %v593, 1.0
      %v623 = vsub.f32 %v594, 1.0
      %v624 = vsub.f32 %v595, 1.0
      %v625 = vsub.f32 %v596, 1.0
      %v626 = vsub.f32 %v597, 1.0
      %v627 = vadd.f32 %v279, 1.0
      %v628 = vadd.f32 %v280, 1.0
      %v629 = vadd.f32 %v281, 1.0
      %v630 = vadd.f32 %v282, 1.0
      %v631 = vadd.f32 %v283, 1.0
      %v632 = vadd.f32 %v284, 1.0
      %v633 = vadd.f32 %v285, 1.0
      %v634 = vadd.f32 %v286, 1.0
      %v635 = vadd.f32 %v287, 1.0
      %v636 = vadd.f32 %v288, 1.0
      %v637 = vadd.f32 %v289, 1.0
      %v638 = vadd.f32 %v290, 1.0
      %v639 = vadd.f32 %v291, 1.0
      %v640 = vadd.f32 %v292, 1.0
      %v641 = vadd.f32 %v293, 1.0
      %v642 = vadd.f32 %v294, 1.0
      %v643 = vadd.f32 %v295, 1.0
      %v644 = vadd.f32 %v296, 1.0
      %v645 = vadd.f32 %v297, 1.0
      %v646 = vadd.f32 %v298, 1.0
      %v647 = vadd.f32 %v299, 1.0
      %v648 = vadd.f32 %v300, 1.0
      %v649 = vadd.f32 %v301, 1.0
      %v650 = vadd.f32 %v302, 1.0
      %v651 = vadd.f32 %v303, 1.0
      %v652 = vadd.f32 %v304, 1.0
      %v653 = vadd.f32 %v305, 1.0
      %v654 = vadd.f32 %v306, 1.0
      %v655 = vadd.f32 %v307, 1.0
      %v656 = vmin.f32 %v627, 14.0
      %v657 = vmin.f32 %v628, 14.0
      %v658 = vmin.f32 %v629, 14.0
      %v659 = vmin.f32 %v630, 14.0
      %v660 = vmin.f32 %v631, 14.0
      %v661 = vmin.f32 %v632, 14.0
      %v662 = vmin.f32 %v633, 14.0
      %v663 = vmin.f32 %v634, 14.0
      %v664 = vmin.f32 %v635, 14.0
      %v665 = vmin.f32 %v636, 14.0
      %v666 = vmin.f32 %v637, 14.0
      %v667 = vmin.f32 %v638, 14.0
      %v668 = vmin.f32 %v639, 14.0
      %v669 = vmin.f32 %v640, 14.0
      %v670 = vmin.f32 %v641, 14.0
      %v671 = vmin.f32 %v642, 14.0
      %v672 = vmin.f32 %v643, 14.0
      %v673 = vmin.f32 %v644, 14.0
      %v674 = vmin.f32 %v645, 14.0
      %v675 = vmin.f32 %v646, 14.0
      %v676 = vmin.f32 %v647, 14.0
      %v677 = vmin.f32 %v648, 14.0
      %v678 = vmin.f32 %v649, 14.0
      %v679 = vmin.f32 %v650, 14.0
      %v680 = vmin.f32 %v651, 14.0
      %v681 = vmin.f32 %v652, 14.0
      %v682 = vmin.f32 %v653, 14.0
      %v683 = vmin.f32 %v654, 14.0
      %v684 = vmin.f32 %v655, 14.0
      %v685 = vadd.f32 %v656, 1.0
      %v686 = vadd.f32 %v657, 1.0
      %v687 = vadd.f32 %v658, 1.0
      %v688 = vadd.f32 %v659, 1.0
      %v689 = vadd.f32 %v660, 1.0
      %v690 = vadd.f32 %v661, 1.0
      %v691 = vadd.f32 %v662, 1.0
      %v692 = vadd.f32 %v663, 1.0
      %v693 = vadd.f32 %v664, 1.0
      %v694 = vadd.f32 %v665, 1.0
      %v695 = vadd.f32 %v666, 1.0
      %v696 = vadd.f32 %v667, 1.0
      %v697 = vadd.f32 %v668, 1.0
      %v698 = vadd.f32 %v669, 1.0
      %v699 = vadd.f32 %v670, 1.0
      %v700 = vadd.f32 %v671, 1.0
      %v701 = vadd.f32 %v672, 1.0
      %v702 = vadd.f32 %v673, 1.0
      %v703 = vadd.f32 %v674, 1.0
      %v704 = vadd.f32 %v675, 1.0
      %v705 = vadd.f32 %v676, 1.0
      %v706 = vadd.f32 %v677, 1.0
      %v707 = vadd.f32 %v678, 1.0
      %v708 = vadd.f32 %v679, 1.0
      %v709 = vadd.f32 %v680, 1.0
      %v710 = vadd.f32 %v681, 1.0
      %v711 = vadd.f32 %v682, 1.0
      %v712 = vadd.f32 %v683, 1.0
      %v713 = vadd.f32 %v684, 1.0
      %v714 = vlaneseq
      %v715 = vand.u32 %v714, 127
      %v716 = vld [vmem:[%s152] sm:$0xf]
      %v718 = vlaneseq
      %v719 = vshrl.u32 %v718, 7
      %v720 = vsub.s32 0, %v719
      %v721 = vrot.slane %v716, %v720
      %v722 = vlaneseq
      %v723 = vshrl.u32 %v722, 7
      %v724 = vsub.s32 2, %v723
      %v725 = vrot.slane %v716, %v724
      %v728 = vlaneseq
      %v729 = vshrl.u32 %v728, 7
      %v730 = vsub.s32 0, %v729
      %v731 = vrot.slane %v721, %v730
      %v732 = vlaneseq
      %v733 = vshrl.u32 %v732, 7
      %v734 = vsub.s32 0, %v733
      %v735 = vrot.slane %v725, %v734
      %v736 = vsub.f32 %v731, %v424
      %v737 = vsub.f32 %v735, %v424
      %v738 = vsub.f32 %v731, %v425
      %v739 = vsub.f32 %v735, %v425
      %v740 = vsub.f32 %v731, %v426
      %v741 = vsub.f32 %v735, %v426
      %v742 = vsub.f32 %v731, %v427
      %v743 = vsub.f32 %v735, %v427
      %v744 = vsub.f32 %v731, %v428
      %v745 = vsub.f32 %v735, %v428
      %v746 = vsub.f32 %v731, %v429
      %v747 = vsub.f32 %v735, %v429
      %v748 = vsub.f32 %v731, %v430
      %v749 = vsub.f32 %v735, %v430
      %v750 = vsub.f32 %v731, %v431
      %v751 = vsub.f32 %v735, %v431
      %v752 = vsub.f32 %v731, %v432
      %v753 = vsub.f32 %v735, %v432
      %v754 = vsub.f32 %v731, %v433
      %v755 = vsub.f32 %v735, %v433
      %v756 = vsub.f32 %v731, %v434
      %v757 = vsub.f32 %v735, %v434
      %v758 = vsub.f32 %v731, %v435
      %v759 = vsub.f32 %v735, %v435
      %v760 = vsub.f32 %v731, %v436
      %v761 = vsub.f32 %v735, %v436
      %v762 = vsub.f32 %v731, %v437
      %v763 = vsub.f32 %v735, %v437
      %v764 = vsub.f32 %v731, %v438
      %v765 = vsub.f32 %v735, %v438
      %v766 = vsub.f32 %v731, %v439
      %v767 = vsub.f32 %v735, %v439
      %v768 = vsub.f32 %v731, %v440
      %v769 = vsub.f32 %v735, %v440
      %v770 = vsub.f32 %v731, %v441
      %v771 = vsub.f32 %v735, %v441
      %v772 = vsub.f32 %v731, %v442
      %v773 = vsub.f32 %v735, %v442
      %v774 = vsub.f32 %v731, %v443
      %v775 = vsub.f32 %v735, %v443
      %v776 = vsub.f32 %v731, %v444
      %v777 = vsub.f32 %v735, %v444
      %v778 = vsub.f32 %v731, %v445
      %v779 = vsub.f32 %v735, %v445
      %v780 = vsub.f32 %v731, %v446
      %v781 = vsub.f32 %v735, %v446
      %v782 = vsub.f32 %v731, %v447
      %v783 = vsub.f32 %v735, %v447
      %v784 = vsub.f32 %v731, %v448
      %v785 = vsub.f32 %v735, %v448
      %v786 = vsub.f32 %v731, %v449
      %v787 = vsub.f32 %v735, %v449
      %v788 = vsub.f32 %v731, %v450
      %v789 = vsub.f32 %v735, %v450
      %v790 = vsub.f32 %v731, %v451
      %v791 = vsub.f32 %v735, %v451
      %v792 = vsub.f32 %v731, %v452
      %v793 = vsub.f32 %v735, %v452
      %v794 = vsub.f32 %v511, %v731
      %v795 = vsub.f32 %v511, %v735
      %v796 = vsub.f32 %v512, %v731
      %v797 = vsub.f32 %v512, %v735
      %v798 = vsub.f32 %v513, %v731
      %v799 = vsub.f32 %v513, %v735
      %v800 = vsub.f32 %v514, %v731
      %v801 = vsub.f32 %v514, %v735
      %v802 = vsub.f32 %v515, %v731
      %v803 = vsub.f32 %v515, %v735
      %v804 = vsub.f32 %v516, %v731
      %v805 = vsub.f32 %v516, %v735
      %v806 = vsub.f32 %v517, %v731
      %v807 = vsub.f32 %v517, %v735
      %v808 = vsub.f32 %v518, %v731
      %v809 = vsub.f32 %v518, %v735
      %v810 = vsub.f32 %v519, %v731
      %v811 = vsub.f32 %v519, %v735
      %v812 = vsub.f32 %v520, %v731
      %v813 = vsub.f32 %v520, %v735
      %v814 = vsub.f32 %v521, %v731
      %v815 = vsub.f32 %v521, %v735
      %v816 = vsub.f32 %v522, %v731
      %v817 = vsub.f32 %v522, %v735
      %v818 = vsub.f32 %v523, %v731
      %v819 = vsub.f32 %v523, %v735
      %v820 = vsub.f32 %v524, %v731
      %v821 = vsub.f32 %v524, %v735
      %v822 = vsub.f32 %v525, %v731
      %v823 = vsub.f32 %v525, %v735
      %v824 = vsub.f32 %v526, %v731
      %v825 = vsub.f32 %v526, %v735
      %v826 = vsub.f32 %v527, %v731
      %v827 = vsub.f32 %v527, %v735
      %v828 = vsub.f32 %v528, %v731
      %v829 = vsub.f32 %v528, %v735
      %v830 = vsub.f32 %v529, %v731
      %v831 = vsub.f32 %v529, %v735
      %v832 = vsub.f32 %v530, %v731
      %v833 = vsub.f32 %v530, %v735
      %v834 = vsub.f32 %v531, %v731
      %v835 = vsub.f32 %v531, %v735
      %v836 = vsub.f32 %v532, %v731
      %v837 = vsub.f32 %v532, %v735
      %v838 = vsub.f32 %v533, %v731
      %v839 = vsub.f32 %v533, %v735
      %v840 = vsub.f32 %v534, %v731
      %v841 = vsub.f32 %v534, %v735
      %v842 = vsub.f32 %v535, %v731
      %v843 = vsub.f32 %v535, %v735
      %v844 = vsub.f32 %v536, %v731
      %v845 = vsub.f32 %v536, %v735
      %v846 = vsub.f32 %v537, %v731
      %v847 = vsub.f32 %v537, %v735
      %v848 = vsub.f32 %v538, %v731
      %v849 = vsub.f32 %v538, %v735
      %v850 = vsub.f32 %v539, %v731
      %v851 = vsub.f32 %v539, %v735
      %v852 = vmin.f32 %v736, %v794
      %v853 = vmin.f32 %v737, %v795
      %v854 = vmin.f32 %v738, %v796
      %v855 = vmin.f32 %v739, %v797
      %v856 = vmin.f32 %v740, %v798
      %v857 = vmin.f32 %v741, %v799
      %v858 = vmin.f32 %v742, %v800
      %v859 = vmin.f32 %v743, %v801
      %v860 = vmin.f32 %v744, %v802
      %v861 = vmin.f32 %v745, %v803
      %v862 = vmin.f32 %v746, %v804
      %v863 = vmin.f32 %v747, %v805
      %v864 = vmin.f32 %v748, %v806
      %v865 = vmin.f32 %v749, %v807
      %v866 = vmin.f32 %v750, %v808
      %v867 = vmin.f32 %v751, %v809
      %v868 = vmin.f32 %v752, %v810
      %v869 = vmin.f32 %v753, %v811
      %v870 = vmin.f32 %v754, %v812
      %v871 = vmin.f32 %v755, %v813
      %v872 = vmin.f32 %v756, %v814
      %v873 = vmin.f32 %v757, %v815
      %v874 = vmin.f32 %v758, %v816
      %v875 = vmin.f32 %v759, %v817
      %v876 = vmin.f32 %v760, %v818
      %v877 = vmin.f32 %v761, %v819
      %v878 = vmin.f32 %v762, %v820
      %v879 = vmin.f32 %v763, %v821
      %v880 = vmin.f32 %v764, %v822
      %v881 = vmin.f32 %v765, %v823
      %v882 = vmin.f32 %v766, %v824
      %v883 = vmin.f32 %v767, %v825
      %v884 = vmin.f32 %v768, %v826
      %v885 = vmin.f32 %v769, %v827
      %v886 = vmin.f32 %v770, %v828
      %v887 = vmin.f32 %v771, %v829
      %v888 = vmin.f32 %v772, %v830
      %v889 = vmin.f32 %v773, %v831
      %v890 = vmin.f32 %v774, %v832
      %v891 = vmin.f32 %v775, %v833
      %v892 = vmin.f32 %v776, %v834
      %v893 = vmin.f32 %v777, %v835
      %v894 = vmin.f32 %v778, %v836
      %v895 = vmin.f32 %v779, %v837
      %v896 = vmin.f32 %v780, %v838
      %v897 = vmin.f32 %v781, %v839
      %v898 = vmin.f32 %v782, %v840
      %v899 = vmin.f32 %v783, %v841
      %v900 = vmin.f32 %v784, %v842
      %v901 = vmin.f32 %v785, %v843
      %v902 = vmin.f32 %v786, %v844
      %v903 = vmin.f32 %v787, %v845
      %v904 = vmin.f32 %v788, %v846
      %v905 = vmin.f32 %v789, %v847
      %v906 = vmin.f32 %v790, %v848
      %v907 = vmin.f32 %v791, %v849
      %v908 = vmin.f32 %v792, %v850
      %v909 = vmin.f32 %v793, %v851
      %v910 = vmax.f32 %v852, 0.0
      %v911 = vmax.f32 %v853, 0.0
      %v912 = vmax.f32 %v854, 0.0
      %v913 = vmax.f32 %v855, 0.0
      %v914 = vmax.f32 %v856, 0.0
      %v915 = vmax.f32 %v857, 0.0
      %v916 = vmax.f32 %v858, 0.0
      %v917 = vmax.f32 %v859, 0.0
      %v918 = vmax.f32 %v860, 0.0
      %v919 = vmax.f32 %v861, 0.0
      %v920 = vmax.f32 %v862, 0.0
      %v921 = vmax.f32 %v863, 0.0
      %v922 = vmax.f32 %v864, 0.0
      %v923 = vmax.f32 %v865, 0.0
      %v924 = vmax.f32 %v866, 0.0
      %v925 = vmax.f32 %v867, 0.0
      %v926 = vmax.f32 %v868, 0.0
      %v927 = vmax.f32 %v869, 0.0
      %v928 = vmax.f32 %v870, 0.0
      %v929 = vmax.f32 %v871, 0.0
      %v930 = vmax.f32 %v872, 0.0
      %v931 = vmax.f32 %v873, 0.0
      %v932 = vmax.f32 %v874, 0.0
      %v933 = vmax.f32 %v875, 0.0
      %v934 = vmax.f32 %v876, 0.0
      %v935 = vmax.f32 %v877, 0.0
      %v936 = vmax.f32 %v878, 0.0
      %v937 = vmax.f32 %v879, 0.0
      %v938 = vmax.f32 %v880, 0.0
      %v939 = vmax.f32 %v881, 0.0
      %v940 = vmax.f32 %v882, 0.0
      %v941 = vmax.f32 %v883, 0.0
      %v942 = vmax.f32 %v884, 0.0
      %v943 = vmax.f32 %v885, 0.0
      %v944 = vmax.f32 %v886, 0.0
      %v945 = vmax.f32 %v887, 0.0
      %v946 = vmax.f32 %v888, 0.0
      %v947 = vmax.f32 %v889, 0.0
      %v948 = vmax.f32 %v890, 0.0
      %v949 = vmax.f32 %v891, 0.0
      %v950 = vmax.f32 %v892, 0.0
      %v951 = vmax.f32 %v893, 0.0
      %v952 = vmax.f32 %v894, 0.0
      %v953 = vmax.f32 %v895, 0.0
      %v954 = vmax.f32 %v896, 0.0
      %v955 = vmax.f32 %v897, 0.0
      %v956 = vmax.f32 %v898, 0.0
      %v957 = vmax.f32 %v899, 0.0
      %v958 = vmax.f32 %v900, 0.0
      %v959 = vmax.f32 %v901, 0.0
      %v960 = vmax.f32 %v902, 0.0
      %v961 = vmax.f32 %v903, 0.0
      %v962 = vmax.f32 %v904, 0.0
      %v963 = vmax.f32 %v905, 0.0
      %v964 = vmax.f32 %v906, 0.0
      %v965 = vmax.f32 %v907, 0.0
      %v966 = vmax.f32 %v908, 0.0
      %v967 = vmax.f32 %v909, 0.0
      %v968 = vmin.f32 %v910, 1.0
      %v969 = vmin.f32 %v911, 1.0
      %v970 = vmin.f32 %v912, 1.0
      %v971 = vmin.f32 %v913, 1.0
      %v972 = vmin.f32 %v914, 1.0
      %v973 = vmin.f32 %v915, 1.0
      %v974 = vmin.f32 %v916, 1.0
      %v975 = vmin.f32 %v917, 1.0
      %v976 = vmin.f32 %v918, 1.0
      %v977 = vmin.f32 %v919, 1.0
      %v978 = vmin.f32 %v920, 1.0
      %v979 = vmin.f32 %v921, 1.0
      %v980 = vmin.f32 %v922, 1.0
      %v981 = vmin.f32 %v923, 1.0
      %v982 = vmin.f32 %v924, 1.0
      %v983 = vmin.f32 %v925, 1.0
      %v984 = vmin.f32 %v926, 1.0
      %v985 = vmin.f32 %v927, 1.0
      %v986 = vmin.f32 %v928, 1.0
      %v987 = vmin.f32 %v929, 1.0
      %v988 = vmin.f32 %v930, 1.0
      %v989 = vmin.f32 %v931, 1.0
      %v990 = vmin.f32 %v932, 1.0
      %v991 = vmin.f32 %v933, 1.0
      %v992 = vmin.f32 %v934, 1.0
      %v993 = vmin.f32 %v935, 1.0
      %v994 = vmin.f32 %v936, 1.0
      %v995 = vmin.f32 %v937, 1.0
      %v996 = vmin.f32 %v938, 1.0
      %v997 = vmin.f32 %v939, 1.0
      %v998 = vmin.f32 %v940, 1.0
      %v999 = vmin.f32 %v941, 1.0
      %v1000 = vmin.f32 %v942, 1.0
      %v1001 = vmin.f32 %v943, 1.0
      %v1002 = vmin.f32 %v944, 1.0
      %v1003 = vmin.f32 %v945, 1.0
      %v1004 = vmin.f32 %v946, 1.0
      %v1005 = vmin.f32 %v947, 1.0
      %v1006 = vmin.f32 %v948, 1.0
      %v1007 = vmin.f32 %v949, 1.0
      %v1008 = vmin.f32 %v950, 1.0
      %v1009 = vmin.f32 %v951, 1.0
      %v1010 = vmin.f32 %v952, 1.0
      %v1011 = vmin.f32 %v953, 1.0
      %v1012 = vmin.f32 %v954, 1.0
      %v1013 = vmin.f32 %v955, 1.0
      %v1014 = vmin.f32 %v956, 1.0
      %v1015 = vmin.f32 %v957, 1.0
      %v1016 = vmin.f32 %v958, 1.0
      %v1017 = vmin.f32 %v959, 1.0
      %v1018 = vmin.f32 %v960, 1.0
      %v1019 = vmin.f32 %v961, 1.0
      %v1020 = vmin.f32 %v962, 1.0
      %v1021 = vmin.f32 %v963, 1.0
      %v1022 = vmin.f32 %v964, 1.0
      %v1023 = vmin.f32 %v965, 1.0
      %v1024 = vmin.f32 %v966, 1.0
      %v1025 = vmin.f32 %v967, 1.0
      %v1026 = vlaneseq
      %v1027 = vshrl.u32 %v1026, 7
      %v1028 = vsub.s32 1, %v1027
      %v1029 = vrot.slane %v716, %v1028
      %v1030 = vlaneseq
      %v1031 = vshrl.u32 %v1030, 7
      %v1032 = vsub.s32 3, %v1031
      %v1033 = vrot.slane %v716, %v1032
      %v1036 = vlaneseq
      %v1037 = vshrl.u32 %v1036, 7
      %v1038 = vsub.s32 1, %v1037
      %v1039 = vrot.slane %v1029, %v1038
      %v1040 = vlaneseq
      %v1041 = vshrl.u32 %v1040, 7
      %v1042 = vsub.s32 1, %v1041
      %v1043 = vrot.slane %v1033, %v1042
      %v1044 = vsub.f32 %v1039, %v598
      %v1045 = vsub.f32 %v1043, %v598
      %v1046 = vsub.f32 %v1039, %v599
      %v1047 = vsub.f32 %v1043, %v599
      %v1048 = vsub.f32 %v1039, %v600
      %v1049 = vsub.f32 %v1043, %v600
      %v1050 = vsub.f32 %v1039, %v601
      %v1051 = vsub.f32 %v1043, %v601
      %v1052 = vsub.f32 %v1039, %v602
      %v1053 = vsub.f32 %v1043, %v602
      %v1054 = vsub.f32 %v1039, %v603
      %v1055 = vsub.f32 %v1043, %v603
      %v1056 = vsub.f32 %v1039, %v604
      %v1057 = vsub.f32 %v1043, %v604
      %v1058 = vsub.f32 %v1039, %v605
      %v1059 = vsub.f32 %v1043, %v605
      %v1060 = vsub.f32 %v1039, %v606
      %v1061 = vsub.f32 %v1043, %v606
      %v1062 = vsub.f32 %v1039, %v607
      %v1063 = vsub.f32 %v1043, %v607
      %v1064 = vsub.f32 %v1039, %v608
      %v1065 = vsub.f32 %v1043, %v608
      %v1066 = vsub.f32 %v1039, %v609
      %v1067 = vsub.f32 %v1043, %v609
      %v1068 = vsub.f32 %v1039, %v610
      %v1069 = vsub.f32 %v1043, %v610
      %v1070 = vsub.f32 %v1039, %v611
      %v1071 = vsub.f32 %v1043, %v611
      %v1072 = vsub.f32 %v1039, %v612
      %v1073 = vsub.f32 %v1043, %v612
      %v1074 = vsub.f32 %v1039, %v613
      %v1075 = vsub.f32 %v1043, %v613
      %v1076 = vsub.f32 %v1039, %v614
      %v1077 = vsub.f32 %v1043, %v614
      %v1078 = vsub.f32 %v1039, %v615
      %v1079 = vsub.f32 %v1043, %v615
      %v1080 = vsub.f32 %v1039, %v616
      %v1081 = vsub.f32 %v1043, %v616
      %v1082 = vsub.f32 %v1039, %v617
      %v1083 = vsub.f32 %v1043, %v617
      %v1084 = vsub.f32 %v1039, %v618
      %v1085 = vsub.f32 %v1043, %v618
      %v1086 = vsub.f32 %v1039, %v619
      %v1087 = vsub.f32 %v1043, %v619
      %v1088 = vsub.f32 %v1039, %v620
      %v1089 = vsub.f32 %v1043, %v620
      %v1090 = vsub.f32 %v1039, %v621
      %v1091 = vsub.f32 %v1043, %v621
      %v1092 = vsub.f32 %v1039, %v622
      %v1093 = vsub.f32 %v1043, %v622
      %v1094 = vsub.f32 %v1039, %v623
      %v1095 = vsub.f32 %v1043, %v623
      %v1096 = vsub.f32 %v1039, %v624
      %v1097 = vsub.f32 %v1043, %v624
      %v1098 = vsub.f32 %v1039, %v625
      %v1099 = vsub.f32 %v1043, %v625
      %v1100 = vsub.f32 %v1039, %v626
      %v1101 = vsub.f32 %v1043, %v626
      %v1102 = vsub.f32 %v685, %v1039
      %v1103 = vsub.f32 %v685, %v1043
      %v1104 = vsub.f32 %v686, %v1039
      %v1105 = vsub.f32 %v686, %v1043
      %v1106 = vsub.f32 %v687, %v1039
      %v1107 = vsub.f32 %v687, %v1043
      %v1108 = vsub.f32 %v688, %v1039
      %v1109 = vsub.f32 %v688, %v1043
      %v1110 = vsub.f32 %v689, %v1039
      %v1111 = vsub.f32 %v689, %v1043
      %v1112 = vsub.f32 %v690, %v1039
      %v1113 = vsub.f32 %v690, %v1043
      %v1114 = vsub.f32 %v691, %v1039
      %v1115 = vsub.f32 %v691, %v1043
      %v1116 = vsub.f32 %v692, %v1039
      %v1117 = vsub.f32 %v692, %v1043
      %v1118 = vsub.f32 %v693, %v1039
      %v1119 = vsub.f32 %v693, %v1043
      %v1120 = vsub.f32 %v694, %v1039
      %v1121 = vsub.f32 %v694, %v1043
      %v1122 = vsub.f32 %v695, %v1039
      %v1123 = vsub.f32 %v695, %v1043
      %v1124 = vsub.f32 %v696, %v1039
      %v1125 = vsub.f32 %v696, %v1043
      %v1126 = vsub.f32 %v697, %v1039
      %v1127 = vsub.f32 %v697, %v1043
      %v1128 = vsub.f32 %v698, %v1039
      %v1129 = vsub.f32 %v698, %v1043
      %v1130 = vsub.f32 %v699, %v1039
      %v1131 = vsub.f32 %v699, %v1043
      %v1132 = vsub.f32 %v700, %v1039
      %v1133 = vsub.f32 %v700, %v1043
      %v1134 = vsub.f32 %v701, %v1039
      %v1135 = vsub.f32 %v701, %v1043
      %v1136 = vsub.f32 %v702, %v1039
      %v1137 = vsub.f32 %v702, %v1043
      %v1138 = vsub.f32 %v703, %v1039
      %v1139 = vsub.f32 %v703, %v1043
      %v1140 = vsub.f32 %v704, %v1039
      %v1141 = vsub.f32 %v704, %v1043
      %v1142 = vsub.f32 %v705, %v1039
      %v1143 = vsub.f32 %v705, %v1043
      %v1144 = vsub.f32 %v706, %v1039
      %v1145 = vsub.f32 %v706, %v1043
      %v1146 = vsub.f32 %v707, %v1039
      %v1147 = vsub.f32 %v707, %v1043
      %v1148 = vsub.f32 %v708, %v1039
      %v1149 = vsub.f32 %v708, %v1043
      %v1150 = vsub.f32 %v709, %v1039
      %v1151 = vsub.f32 %v709, %v1043
      %v1152 = vsub.f32 %v710, %v1039
      %v1153 = vsub.f32 %v710, %v1043
      %v1154 = vsub.f32 %v711, %v1039
      %v1155 = vsub.f32 %v711, %v1043
      %v1156 = vsub.f32 %v712, %v1039
      %v1157 = vsub.f32 %v712, %v1043
      %v1158 = vsub.f32 %v713, %v1039
      %v1159 = vsub.f32 %v713, %v1043
      %v1160 = vmin.f32 %v1044, %v1102
      %v1161 = vmin.f32 %v1045, %v1103
      %v1162 = vmin.f32 %v1046, %v1104
      %v1163 = vmin.f32 %v1047, %v1105
      %v1164 = vmin.f32 %v1048, %v1106
      %v1165 = vmin.f32 %v1049, %v1107
      %v1166 = vmin.f32 %v1050, %v1108
      %v1167 = vmin.f32 %v1051, %v1109
      %v1168 = vmin.f32 %v1052, %v1110
      %v1169 = vmin.f32 %v1053, %v1111
      %v1170 = vmin.f32 %v1054, %v1112
      %v1171 = vmin.f32 %v1055, %v1113
      %v1172 = vmin.f32 %v1056, %v1114
      %v1173 = vmin.f32 %v1057, %v1115
      %v1174 = vmin.f32 %v1058, %v1116
      %v1175 = vmin.f32 %v1059, %v1117
      %v1176 = vmin.f32 %v1060, %v1118
      %v1177 = vmin.f32 %v1061, %v1119
      %v1178 = vmin.f32 %v1062, %v1120
      %v1179 = vmin.f32 %v1063, %v1121
      %v1180 = vmin.f32 %v1064, %v1122
      %v1181 = vmin.f32 %v1065, %v1123
      %v1182 = vmin.f32 %v1066, %v1124
      %v1183 = vmin.f32 %v1067, %v1125
      %v1184 = vmin.f32 %v1068, %v1126
      %v1185 = vmin.f32 %v1069, %v1127
      %v1186 = vmin.f32 %v1070, %v1128
      %v1187 = vmin.f32 %v1071, %v1129
      %v1188 = vmin.f32 %v1072, %v1130
      %v1189 = vmin.f32 %v1073, %v1131
      %v1190 = vmin.f32 %v1074, %v1132
      %v1191 = vmin.f32 %v1075, %v1133
      %v1192 = vmin.f32 %v1076, %v1134
      %v1193 = vmin.f32 %v1077, %v1135
      %v1194 = vmin.f32 %v1078, %v1136
      %v1195 = vmin.f32 %v1079, %v1137
      %v1196 = vmin.f32 %v1080, %v1138
      %v1197 = vmin.f32 %v1081, %v1139
      %v1198 = vmin.f32 %v1082, %v1140
      %v1199 = vmin.f32 %v1083, %v1141
      %v1200 = vmin.f32 %v1084, %v1142
      %v1201 = vmin.f32 %v1085, %v1143
      %v1202 = vmin.f32 %v1086, %v1144
      %v1203 = vmin.f32 %v1087, %v1145
      %v1204 = vmin.f32 %v1088, %v1146
      %v1205 = vmin.f32 %v1089, %v1147
      %v1206 = vmin.f32 %v1090, %v1148
      %v1207 = vmin.f32 %v1091, %v1149
      %v1208 = vmin.f32 %v1092, %v1150
      %v1209 = vmin.f32 %v1093, %v1151
      %v1210 = vmin.f32 %v1094, %v1152
      %v1211 = vmin.f32 %v1095, %v1153
      %v1212 = vmin.f32 %v1096, %v1154
      %v1213 = vmin.f32 %v1097, %v1155
      %v1214 = vmin.f32 %v1098, %v1156
      %v1215 = vmin.f32 %v1099, %v1157
      %v1216 = vmin.f32 %v1100, %v1158
      %v1217 = vmin.f32 %v1101, %v1159
      %v1218 = vmax.f32 %v1160, 0.0
      %v1219 = vmax.f32 %v1161, 0.0
      %v1220 = vmax.f32 %v1162, 0.0
      %v1221 = vmax.f32 %v1163, 0.0
      %v1222 = vmax.f32 %v1164, 0.0
      %v1223 = vmax.f32 %v1165, 0.0
      %v1224 = vmax.f32 %v1166, 0.0
      %v1225 = vmax.f32 %v1167, 0.0
      %v1226 = vmax.f32 %v1168, 0.0
      %v1227 = vmax.f32 %v1169, 0.0
      %v1228 = vmax.f32 %v1170, 0.0
      %v1229 = vmax.f32 %v1171, 0.0
      %v1230 = vmax.f32 %v1172, 0.0
      %v1231 = vmax.f32 %v1173, 0.0
      %v1232 = vmax.f32 %v1174, 0.0
      %v1233 = vmax.f32 %v1175, 0.0
      %v1234 = vmax.f32 %v1176, 0.0
      %v1235 = vmax.f32 %v1177, 0.0
      %v1236 = vmax.f32 %v1178, 0.0
      %v1237 = vmax.f32 %v1179, 0.0
      %v1238 = vmax.f32 %v1180, 0.0
      %v1239 = vmax.f32 %v1181, 0.0
      %v1240 = vmax.f32 %v1182, 0.0
      %v1241 = vmax.f32 %v1183, 0.0
      %v1242 = vmax.f32 %v1184, 0.0
      %v1243 = vmax.f32 %v1185, 0.0
      %v1244 = vmax.f32 %v1186, 0.0
      %v1245 = vmax.f32 %v1187, 0.0
      %v1246 = vmax.f32 %v1188, 0.0
      %v1247 = vmax.f32 %v1189, 0.0
      %v1248 = vmax.f32 %v1190, 0.0
      %v1249 = vmax.f32 %v1191, 0.0
      %v1250 = vmax.f32 %v1192, 0.0
      %v1251 = vmax.f32 %v1193, 0.0
      %v1252 = vmax.f32 %v1194, 0.0
      %v1253 = vmax.f32 %v1195, 0.0
      %v1254 = vmax.f32 %v1196, 0.0
      %v1255 = vmax.f32 %v1197, 0.0
      %v1256 = vmax.f32 %v1198, 0.0
      %v1257 = vmax.f32 %v1199, 0.0
      %v1258 = vmax.f32 %v1200, 0.0
      %v1259 = vmax.f32 %v1201, 0.0
      %v1260 = vmax.f32 %v1202, 0.0
      %v1261 = vmax.f32 %v1203, 0.0
      %v1262 = vmax.f32 %v1204, 0.0
      %v1263 = vmax.f32 %v1205, 0.0
      %v1264 = vmax.f32 %v1206, 0.0
      %v1265 = vmax.f32 %v1207, 0.0
      %v1266 = vmax.f32 %v1208, 0.0
      %v1267 = vmax.f32 %v1209, 0.0
      %v1268 = vmax.f32 %v1210, 0.0
      %v1269 = vmax.f32 %v1211, 0.0
      %v1270 = vmax.f32 %v1212, 0.0
      %v1271 = vmax.f32 %v1213, 0.0
      %v1272 = vmax.f32 %v1214, 0.0
      %v1273 = vmax.f32 %v1215, 0.0
      %v1274 = vmax.f32 %v1216, 0.0
      %v1275 = vmax.f32 %v1217, 0.0
      %v1276 = vmin.f32 %v1218, 1.0
      %v1277 = vmin.f32 %v1219, 1.0
      %v1278 = vmin.f32 %v1220, 1.0
      %v1279 = vmin.f32 %v1221, 1.0
      %v1280 = vmin.f32 %v1222, 1.0
      %v1281 = vmin.f32 %v1223, 1.0
      %v1282 = vmin.f32 %v1224, 1.0
      %v1283 = vmin.f32 %v1225, 1.0
      %v1284 = vmin.f32 %v1226, 1.0
      %v1285 = vmin.f32 %v1227, 1.0
      %v1286 = vmin.f32 %v1228, 1.0
      %v1287 = vmin.f32 %v1229, 1.0
      %v1288 = vmin.f32 %v1230, 1.0
      %v1289 = vmin.f32 %v1231, 1.0
      %v1290 = vmin.f32 %v1232, 1.0
      %v1291 = vmin.f32 %v1233, 1.0
      %v1292 = vmin.f32 %v1234, 1.0
      %v1293 = vmin.f32 %v1235, 1.0
      %v1294 = vmin.f32 %v1236, 1.0
      %v1295 = vmin.f32 %v1237, 1.0
      %v1296 = vmin.f32 %v1238, 1.0
      %v1297 = vmin.f32 %v1239, 1.0
      %v1298 = vmin.f32 %v1240, 1.0
      %v1299 = vmin.f32 %v1241, 1.0
      %v1300 = vmin.f32 %v1242, 1.0
      %v1301 = vmin.f32 %v1243, 1.0
      %v1302 = vmin.f32 %v1244, 1.0
      %v1303 = vmin.f32 %v1245, 1.0
      %v1304 = vmin.f32 %v1246, 1.0
      %v1305 = vmin.f32 %v1247, 1.0
      %v1306 = vmin.f32 %v1248, 1.0
      %v1307 = vmin.f32 %v1249, 1.0
      %v1308 = vmin.f32 %v1250, 1.0
      %v1309 = vmin.f32 %v1251, 1.0
      %v1310 = vmin.f32 %v1252, 1.0
      %v1311 = vmin.f32 %v1253, 1.0
      %v1312 = vmin.f32 %v1254, 1.0
      %v1313 = vmin.f32 %v1255, 1.0
      %v1314 = vmin.f32 %v1256, 1.0
      %v1315 = vmin.f32 %v1257, 1.0
      %v1316 = vmin.f32 %v1258, 1.0
      %v1317 = vmin.f32 %v1259, 1.0
      %v1318 = vmin.f32 %v1260, 1.0
      %v1319 = vmin.f32 %v1261, 1.0
      %v1320 = vmin.f32 %v1262, 1.0
      %v1321 = vmin.f32 %v1263, 1.0
      %v1322 = vmin.f32 %v1264, 1.0
      %v1323 = vmin.f32 %v1265, 1.0
      %v1324 = vmin.f32 %v1266, 1.0
      %v1325 = vmin.f32 %v1267, 1.0
      %v1326 = vmin.f32 %v1268, 1.0
      %v1327 = vmin.f32 %v1269, 1.0
      %v1328 = vmin.f32 %v1270, 1.0
      %v1329 = vmin.f32 %v1271, 1.0
      %v1330 = vmin.f32 %v1272, 1.0
      %v1331 = vmin.f32 %v1273, 1.0
      %v1332 = vmin.f32 %v1274, 1.0
      %v1333 = vmin.f32 %v1275, 1.0
      %v1334 = vmul.f32 %v968, %v1276
      %v1335 = vmul.f32 %v969, %v1277
      %v1336 = vmul.f32 %v970, %v1278
      %v1337 = vmul.f32 %v971, %v1279
      %v1338 = vmul.f32 %v972, %v1280
      %v1339 = vmul.f32 %v973, %v1281
      %v1340 = vmul.f32 %v974, %v1282
      %v1341 = vmul.f32 %v975, %v1283
      %v1342 = vmul.f32 %v976, %v1284
      %v1343 = vmul.f32 %v977, %v1285
      %v1344 = vmul.f32 %v978, %v1286
      %v1345 = vmul.f32 %v979, %v1287
      %v1346 = vmul.f32 %v980, %v1288
      %v1347 = vmul.f32 %v981, %v1289
      %v1348 = vmul.f32 %v982, %v1290
      %v1349 = vmul.f32 %v983, %v1291
      %v1350 = vmul.f32 %v984, %v1292
      %v1351 = vmul.f32 %v985, %v1293
      %v1352 = vmul.f32 %v986, %v1294
      %v1353 = vmul.f32 %v987, %v1295
      %v1354 = vmul.f32 %v988, %v1296
      %v1355 = vmul.f32 %v989, %v1297
      %v1356 = vmul.f32 %v990, %v1298
      %v1357 = vmul.f32 %v991, %v1299
      %v1358 = vmul.f32 %v992, %v1300
      %v1359 = vmul.f32 %v993, %v1301
      %v1360 = vmul.f32 %v994, %v1302
      %v1361 = vmul.f32 %v995, %v1303
      %v1362 = vmul.f32 %v996, %v1304
      %v1363 = vmul.f32 %v997, %v1305
      %v1364 = vmul.f32 %v998, %v1306
      %v1365 = vmul.f32 %v999, %v1307
      %v1366 = vmul.f32 %v1000, %v1308
      %v1367 = vmul.f32 %v1001, %v1309
      %v1368 = vmul.f32 %v1002, %v1310
      %v1369 = vmul.f32 %v1003, %v1311
      %v1370 = vmul.f32 %v1004, %v1312
      %v1371 = vmul.f32 %v1005, %v1313
      %v1372 = vmul.f32 %v1006, %v1314
      %v1373 = vmul.f32 %v1007, %v1315
      %v1374 = vmul.f32 %v1008, %v1316
      %v1375 = vmul.f32 %v1009, %v1317
      %v1376 = vmul.f32 %v1010, %v1318
      %v1377 = vmul.f32 %v1011, %v1319
      %v1378 = vmul.f32 %v1012, %v1320
      %v1379 = vmul.f32 %v1013, %v1321
      %v1380 = vmul.f32 %v1014, %v1322
      %v1381 = vmul.f32 %v1015, %v1323
      %v1382 = vmul.f32 %v1016, %v1324
      %v1383 = vmul.f32 %v1017, %v1325
      %v1384 = vmul.f32 %v1018, %v1326
      %v1385 = vmul.f32 %v1019, %v1327
      %v1386 = vmul.f32 %v1020, %v1328
      %v1387 = vmul.f32 %v1021, %v1329
      %v1388 = vmul.f32 %v1022, %v1330
      %v1389 = vmul.f32 %v1023, %v1331
      %v1390 = vmul.f32 %v1024, %v1332
      %v1391 = vmul.f32 %v1025, %v1333
      %v1392 = vld [vmem:[%s157] sm:$0xff]
      %v1393 = vld [vmem:[%s157 + $0x8] sm:$0xff]
      %v1394 = vld [vmem:[%s157 + $0x10] sm:$0xff]
      %v1395 = vld [vmem:[%s157 + $0x18] sm:$0xff]
      %v1396 = vld [vmem:[%s157 + $0x20] sm:$0xff]
      %v1397 = vld [vmem:[%s157 + $0x28] sm:$0xff]
      %v1398 = vld [vmem:[%s157 + $0x30] sm:$0xff]
      %v1399 = vld [vmem:[%s157 + $0x38] sm:$0xff]
      %v1400 = vld [vmem:[%s157 + $0x40] sm:$0xff]
      %v1401 = vld [vmem:[%s157 + $0x48] sm:$0xff]
      %v1402 = vld [vmem:[%s157 + $0x50] sm:$0xff]
      %v1403 = vld [vmem:[%s157 + $0x58] sm:$0xff]
      %v1404 = vld [vmem:[%s157 + $0x60] sm:$0xff]
      %v1405 = vld [vmem:[%s157 + $0x68] sm:$0xff]
      %v1406 = vld [vmem:[%s157 + $0x70] sm:$0xff]
      %v1407 = vld [vmem:[%s157 + $0x78] sm:$0xff]
      %v1408 = vld [vmem:[%s157 + $0x80] sm:$0xff]
      %v1409 = vld [vmem:[%s157 + $0x88] sm:$0xff]
      %v1410 = vld [vmem:[%s157 + $0x90] sm:$0xff]
      %v1411 = vld [vmem:[%s157 + $0x98] sm:$0xff]
      %v1412 = vld [vmem:[%s157 + $0xa0] sm:$0xff]
      %v1413 = vld [vmem:[%s157 + $0xa8] sm:$0xff]
      %v1414 = vld [vmem:[%s157 + $0xb0] sm:$0xff]
      %v1415 = vld [vmem:[%s157 + $0xb8] sm:$0xff]
      %v1416 = vld [vmem:[%s157 + $0xc0] sm:$0xff]
      %v1417 = vld [vmem:[%s157 + $0xc8] sm:$0xff]
      %v1418 = vld [vmem:[%s157 + $0xd0] sm:$0xff]
      %v1419 = vld [vmem:[%s157 + $0xd8] sm:$0xff]
      %v1420 = vld [vmem:[%s157 + $0xe0] sm:$0xff]
      %v1421 = vld [vmem:[%s157 + $0xe8] sm:$0xff]
      %v1422 = vld [vmem:[%s157 + $0xf0] sm:$0xff]
      %v1423 = vld [vmem:[%s157 + $0xf8] sm:$0xff]
      %v1424 = vld [vmem:[%s157 + $0x100] sm:$0xff]
      %v1425 = vld [vmem:[%s157 + $0x108] sm:$0xff]
      %v1426 = vld [vmem:[%s157 + $0x110] sm:$0xff]
      %v1427 = vld [vmem:[%s157 + $0x118] sm:$0xff]
      %v1428 = vld [vmem:[%s157 + $0x120] sm:$0xff]
      %v1429 = vld [vmem:[%s157 + $0x128] sm:$0xff]
      %v1430 = vld [vmem:[%s157 + $0x130] sm:$0xff]
      %v1431 = vld [vmem:[%s157 + $0x138] sm:$0xff]
      %v1432 = vld [vmem:[%s157 + $0x140] sm:$0xff]
      %v1433 = vld [vmem:[%s157 + $0x148] sm:$0xff]
      %v1434 = vld [vmem:[%s157 + $0x150] sm:$0xff]
      %v1435 = vld [vmem:[%s157 + $0x158] sm:$0xff]
      %v1436 = vld [vmem:[%s157 + $0x160] sm:$0xff]
      %v1437 = vld [vmem:[%s157 + $0x168] sm:$0xff]
      %v1438 = vld [vmem:[%s157 + $0x170] sm:$0xff]
      %v1439 = vld [vmem:[%s157 + $0x178] sm:$0xff]
      %v1440 = vld [vmem:[%s157 + $0x180] sm:$0xff]
      %v1441 = vld [vmem:[%s157 + $0x188] sm:$0xff]
      %v1442 = vld [vmem:[%s157 + $0x190] sm:$0xff]
      %v1443 = vld [vmem:[%s157 + $0x198] sm:$0xff]
      %v1444 = vld [vmem:[%s157 + $0x1a0] sm:$0xff]
      %v1445 = vld [vmem:[%s157 + $0x1a8] sm:$0xff]
      %v1446 = vld [vmem:[%s157 + $0x1b0] sm:$0xff]
      %v1447 = vld [vmem:[%s157 + $0x1b8] sm:$0xff]
      %v1448 = vld [vmem:[%s157 + $0x1c0] sm:$0x1]
      %v1449 = vld [vmem:[%s157 + $0x1c8] sm:$0x1]
      %v1450 = vmul.f32 %v1334, %v1392
      %v1451 = vmul.f32 %v1335, %v1393
      %v1452 = vmul.f32 %v1336, %v1394
      %v1453 = vmul.f32 %v1337, %v1395
      %v1454 = vmul.f32 %v1338, %v1396
      %v1455 = vmul.f32 %v1339, %v1397
      %v1456 = vmul.f32 %v1340, %v1398
      %v1457 = vmul.f32 %v1341, %v1399
      %v1458 = vmul.f32 %v1342, %v1400
      %v1459 = vmul.f32 %v1343, %v1401
      %v1460 = vmul.f32 %v1344, %v1402
      %v1461 = vmul.f32 %v1345, %v1403
      %v1462 = vmul.f32 %v1346, %v1404
      %v1463 = vmul.f32 %v1347, %v1405
      %v1464 = vmul.f32 %v1348, %v1406
      %v1465 = vmul.f32 %v1349, %v1407
      %v1466 = vmul.f32 %v1350, %v1408
      %v1467 = vmul.f32 %v1351, %v1409
      %v1468 = vmul.f32 %v1352, %v1410
      %v1469 = vmul.f32 %v1353, %v1411
      %v1470 = vmul.f32 %v1354, %v1412
      %v1471 = vmul.f32 %v1355, %v1413
      %v1472 = vmul.f32 %v1356, %v1414
      %v1473 = vmul.f32 %v1357, %v1415
      %v1474 = vmul.f32 %v1358, %v1416
      %v1475 = vmul.f32 %v1359, %v1417
      %v1476 = vmul.f32 %v1360, %v1418
      %v1477 = vmul.f32 %v1361, %v1419
      %v1478 = vmul.f32 %v1362, %v1420
      %v1479 = vmul.f32 %v1363, %v1421
      %v1480 = vmul.f32 %v1364, %v1422
      %v1481 = vmul.f32 %v1365, %v1423
      %v1482 = vmul.f32 %v1366, %v1424
      %v1483 = vmul.f32 %v1367, %v1425
      %v1484 = vmul.f32 %v1368, %v1426
      %v1485 = vmul.f32 %v1369, %v1427
      %v1486 = vmul.f32 %v1370, %v1428
      %v1487 = vmul.f32 %v1371, %v1429
      %v1488 = vmul.f32 %v1372, %v1430
      %v1489 = vmul.f32 %v1373, %v1431
      %v1490 = vmul.f32 %v1374, %v1432
      %v1491 = vmul.f32 %v1375, %v1433
      %v1492 = vmul.f32 %v1376, %v1434
      %v1493 = vmul.f32 %v1377, %v1435
      %v1494 = vmul.f32 %v1378, %v1436
      %v1495 = vmul.f32 %v1379, %v1437
      %v1496 = vmul.f32 %v1380, %v1438
      %v1497 = vmul.f32 %v1381, %v1439
      %v1498 = vmul.f32 %v1382, %v1440
      %v1499 = vmul.f32 %v1383, %v1441
      %v1500 = vmul.f32 %v1384, %v1442
      %v1501 = vmul.f32 %v1385, %v1443
      %v1502 = vmul.f32 %v1386, %v1444
      %v1503 = vmul.f32 %v1387, %v1445
      %v1504 = vmul.f32 %v1388, %v1446
      %v1505 = vmul.f32 %v1389, %v1447
      %v1506 = vmul.f32 %v1390, %v1448
      %v1507 = vmul.f32 %v1391, %v1449
      %vm1508 = vcmask 793600
      %v1509 = vsel %vm1508, %v1451, 0.0
      %v1510 = vadd.f32 %v1450, %v1509
      %v1511 = vadd.f32 %v1510, %v1452
      %v1512 = vsel %vm1508, %v1453, 0.0
      %v1513 = vadd.f32 %v1511, %v1512
      %v1514 = vadd.f32 %v1513, %v1454
      %v1515 = vsel %vm1508, %v1455, 0.0
      %v1516 = vadd.f32 %v1514, %v1515
      %v1517 = vadd.f32 %v1516, %v1456
      %v1518 = vsel %vm1508, %v1457, 0.0
      %v1519 = vadd.f32 %v1517, %v1518
      %v1520 = vadd.f32 %v1519, %v1458
      %v1521 = vsel %vm1508, %v1459, 0.0
      %v1522 = vadd.f32 %v1520, %v1521
      %v1523 = vadd.f32 %v1522, %v1460
      %v1524 = vsel %vm1508, %v1461, 0.0
      %v1525 = vadd.f32 %v1523, %v1524
      %v1526 = vadd.f32 %v1525, %v1462
      %v1527 = vsel %vm1508, %v1463, 0.0
      %v1528 = vadd.f32 %v1526, %v1527
      %v1529 = vadd.f32 %v1528, %v1464
      %v1530 = vsel %vm1508, %v1465, 0.0
      %v1531 = vadd.f32 %v1529, %v1530
      %v1532 = vadd.f32 %v1531, %v1466
      %v1533 = vsel %vm1508, %v1467, 0.0
      %v1534 = vadd.f32 %v1532, %v1533
      %v1535 = vadd.f32 %v1534, %v1468
      %v1536 = vsel %vm1508, %v1469, 0.0
      %v1537 = vadd.f32 %v1535, %v1536
      %v1538 = vadd.f32 %v1537, %v1470
      %v1539 = vsel %vm1508, %v1471, 0.0
      %v1540 = vadd.f32 %v1538, %v1539
      %v1541 = vadd.f32 %v1540, %v1472
      %v1542 = vsel %vm1508, %v1473, 0.0
      %v1543 = vadd.f32 %v1541, %v1542
      %v1544 = vadd.f32 %v1543, %v1474
      %v1545 = vsel %vm1508, %v1475, 0.0
      %v1546 = vadd.f32 %v1544, %v1545
      %v1547 = vadd.f32 %v1546, %v1476
      %v1548 = vsel %vm1508, %v1477, 0.0
      %v1549 = vadd.f32 %v1547, %v1548
      %v1550 = vadd.f32 %v1549, %v1478
      %v1551 = vsel %vm1508, %v1479, 0.0
      %v1552 = vadd.f32 %v1550, %v1551
      %v1553 = vadd.f32 %v1552, %v1480
      %v1554 = vsel %vm1508, %v1481, 0.0
      %v1555 = vadd.f32 %v1553, %v1554
      %v1556 = vadd.f32 %v1555, %v1482
      %v1557 = vsel %vm1508, %v1483, 0.0
      %v1558 = vadd.f32 %v1556, %v1557
      %v1559 = vadd.f32 %v1558, %v1484
      %v1560 = vsel %vm1508, %v1485, 0.0
      %v1561 = vadd.f32 %v1559, %v1560
      %v1562 = vadd.f32 %v1561, %v1486
      %v1563 = vsel %vm1508, %v1487, 0.0
      %v1564 = vadd.f32 %v1562, %v1563
      %v1565 = vadd.f32 %v1564, %v1488
      %v1566 = vsel %vm1508, %v1489, 0.0
      %v1567 = vadd.f32 %v1565, %v1566
      %v1568 = vadd.f32 %v1567, %v1490
      %v1569 = vsel %vm1508, %v1491, 0.0
      %v1570 = vadd.f32 %v1568, %v1569
      %v1571 = vadd.f32 %v1570, %v1492
      %v1572 = vsel %vm1508, %v1493, 0.0
      %v1573 = vadd.f32 %v1571, %v1572
      %v1574 = vadd.f32 %v1573, %v1494
      %v1575 = vsel %vm1508, %v1495, 0.0
      %v1576 = vadd.f32 %v1574, %v1575
      %v1577 = vadd.f32 %v1576, %v1496
      %v1578 = vsel %vm1508, %v1497, 0.0
      %v1579 = vadd.f32 %v1577, %v1578
      %v1580 = vadd.f32 %v1579, %v1498
      %v1581 = vsel %vm1508, %v1499, 0.0
      %v1582 = vadd.f32 %v1580, %v1581
      %v1583 = vadd.f32 %v1582, %v1500
      %v1584 = vsel %vm1508, %v1501, 0.0
      %v1585 = vadd.f32 %v1583, %v1584
      %v1586 = vadd.f32 %v1585, %v1502
      %v1587 = vsel %vm1508, %v1503, 0.0
      %v1588 = vadd.f32 %v1586, %v1587
      %v1589 = vadd.f32 %v1588, %v1504
      %v1590 = vsel %vm1508, %v1505, 0.0
      %v1591 = vadd.f32 %v1589, %v1590
      %vm1592 = vcmask 1040384
      %v1593 = vsel %vm1592, %v1506, 0.0
      %v1594 = vadd.f32 %v1591, %v1593
      %vm1595 = vcmask 786432
      %v1596 = vsel %vm1595, %v1507, 0.0
      %v1597 = vadd.f32 %v1594, %v1596
      %1598 = vadd.xlane.f32.xlu0 %v1597
      %v1599 = vpop.xlane.xlu0 %1598
      %v1600 = vrot.slane %v1599, 4
      %v1601 = vadd.f32 %v1599, %v1600
      %v1602 = vrot.slane %v1601, 2
      %v1603 = vadd.f32 %v1601, %v1602
      %v1604 = vrot.slane %v1603, 1
      %v1605 = vadd.f32 %v1603, %v1604
      %s1606 = vtos %v1605
      %vm1607 = vcmp.eq.s32.totalorder %v715, 0
      %v1608 = vstv %s1606
      %v1609 = vsel %vm1607, %v1608, 0.0
      %1610 = vst [vmem:[%s161] sm:$0xff] %v1609
      %p1611 = scmp.lt.s32.totalorder %s13, 1
      %s1612 = scalar_select %p1611, %s13, 1
      %s1613 = smul.addr %s1612, 8
      %s1614 = scalar_lea.vmem %s2, %s1613
      // Predicated region
      $region29: #{two_stage_weak_inlier_count.1} parent=27 // pred_check
        %p1615 = pneg %p83
      $region30: #{two_stage_weak_inlier_count.1} parent=27 // pred_check_branch
        %1617 = sbr.rel (%p1615) target = $region32
      $region31: #{two_stage_weak_inlier_count.1} parent=27 // pred_region
        _
      $region32: #{two_stage_weak_inlier_count.1} parent=27 // pred_fallthru
        _
    $region28: #{two_stage_weak_inlier_count.1} parent=5 // pred_fallthru
      _
    %p1618 = scmp.le.s32.totalorder 2, %s8
    // Predicated region
    $region33: #{two_stage_weak_inlier_count.1} parent=5 // pred_check
      %p1619 = pneg %p1618
    $region34: #{two_stage_weak_inlier_count.1} parent=5 // pred_check_branch
      %1621 = sbr.rel (%p1619) target = $region36
    $region35: #{two_stage_weak_inlier_count.1} parent=5 // pred_region
      %s1622 = ssub.s32 %s8, 2
      // Predicated region
      $region37: #{two_stage_weak_inlier_count.1} parent=35 // pred_check
        %p1623 = pneg %p89
      $region38: #{two_stage_weak_inlier_count.1} parent=35 // pred_check_branch
        %1625 = sbr.rel (%p1623) target = $region40
      $region39: #{two_stage_weak_inlier_count.1} parent=35 // pred_region
        %p1626 = scmp.lt.s32.totalorder %s14, 1
        %s1627 = scalar_select %p1626, %s14, 1
        %s1628 = smul.addr %s1627, 8
        %s1629 = scalar_lea.vmem %s2, %s1628
      $region40: #{two_stage_weak_inlier_count.1} parent=35 // pred_fallthru
        _
    $region36: #{two_stage_weak_inlier_count.1} parent=5 // pred_fallthru
      _
  $region6: #{two_stage_weak_inlier_count.1} parent=0 // loop_footer
    %s12 = sadd.s32 1, %s8
  $region7: #{two_stage_weak_inlier_count.1} parent=0 // loop_footer_branch
    %7 = sbr.rel target = $region3
  $region8: #{two_stage_weak_inlier_count.1} parent=0 // loop_exit
    _

</llo_original>
